<compile_context>
chip_gen: v5e
topology: v5e:2x2
jax: 0.10.0
libtpu: 0.0.40
codegen_flags: <defaults>
</compile_context>

<pallas_src>
import functools

import jax
import jax.numpy as jnp
from jax.experimental import pallas as pl
from jax.experimental.pallas import tpu as pltpu

_NEG_INF = -1e30  # finite mask value: causal masking never masks the diagonal


def _layernorm(x, gamma, beta, eps=1e-5):
    # x: (T, C) f32; gamma/beta: (1, C) f32
    mean = jnp.mean(x, axis=-1, keepdims=True)
    var = jnp.mean((x - mean) ** 2, axis=-1, keepdims=True)
    return (x - mean) * jax.lax.rsqrt(var + eps) * gamma + beta


def block_kernel(
    x_ref,        # (1, T, C)            f32
    wqkv_ref,     # (C, 3C)              cdt   [wq*scale | wk | wv]
    wproj_ref,    # (C, C)               cdt
    bproj_ref,    # (1, C)               f32
    w1_ref,       # (n_mlp, C, chunk)    cdt
    b1_ref,       # (n_mlp, 1, chunk)    f32
    w2_ref,       # (n_mlp, chunk, C)    cdt
    b2_ref,       # (1, C)               f32
    g1_ref,       # (1, C) f32  ln1 weight
    be1_ref,      # (1, C) f32  ln1 bias
    g2_ref,       # (1, C) f32  ln2 weight
    be2_ref,      # (1, C) f32  ln2 bias
    o_ref,        # (1, T, C)
    q_scr,        # (nq, tile_q, C)      cdt   scratch: staged Q tiles
    sa_scr,       # (nq, tile_q, C)      cdt   scratch: per-tile attention out
    ff_scr,       # (T, C)               f32   scratch: MLP accumulator
    *,
    n_head,
    tile_q,
    compute_dtype,
):
    cdt = compute_dtype
    f32 = jnp.float32
    use_bf16 = (cdt == jnp.bfloat16)

    x = x_ref[0].astype(f32)                 # (T, C) residual stream in f32
    T, C = x.shape
    H = C // n_head
    nq = T // tile_q
    n_mlp = w1_ref.shape[0]

    # Small parameter vectors loaded once.
    g1 = g1_ref[...]
    be1 = be1_ref[...]
    g2 = g2_ref[...]
    be2 = be2_ref[...]
    bproj = bproj_ref[...]
    b2 = b2_ref[...]

    # ---- 1) multi-head causal self-attention on ln1(x) ----
    xn1 = _layernorm(x, g1, be1)

    # Fused QKV projection: one (T, C) x (C, 3C) matmul, f32 accumulation.
    # The 1/sqrt(H) softmax scale is already folded into the Q weight columns.
    qkv = jnp.dot(xn1.astype(cdt), wqkv_ref[...],
                  preferred_element_type=f32)                 # (T, 3C)
    q = qkv[:, :C]
    k = qkv[:, C:2 * C]
    v = qkv[:, 2 * C:]

    def split_heads(z):   # (T, C) -> (n_head, T, H)
        return jnp.stack([z[:, h * H:(h + 1) * H] for h in range(n_head)],
                         axis=0)

    kb = split_heads(k.astype(cdt))                           # (n_head, T, H)
    vb = split_heads(v.astype(cdt))                           # (n_head, T, H)

    # Stage Q tile-major so the q-tile loop only needs leading-axis ref indexing.
    q_scr[...] = q.astype(cdt).reshape(nq, tile_q, C)

    # Mask iotas built once (per q-tile we only add the tile offset).
    row0 = jax.lax.broadcasted_iota(jnp.int32, (tile_q, T), 0)
    col = jax.lax.broadcasted_iota(jnp.int32, (tile_q, T), 1)

    @pl.loop(0, nq)
    def _attn_q_tile(i):
        q2d = q_scr[i]                                        # (tile_q, C)
        qt = jnp.stack([q2d[:, h * H:(h + 1) * H] for h in range(n_head)],
                       axis=0)                                # (n_head, tile_q, H)
        s = jnp.einsum('nqh,nkh->nqk', qt, kb,
                       preferred_element_type=f32)            # (n_head, tile_q, T)
        # Additive causal mask shared across heads.
        mask = jnp.where(row0 + i * tile_q >= col,
                         jnp.float32(0.0), jnp.float32(_NEG_INF))
        s = s + mask[None, :, :]

        m = jnp.max(s, axis=-1, keepdims=True)                # f32 stats
        pe = s - m
        if use_bf16:
            pe = pe.astype(jnp.bfloat16)                      # bf16 EUP exp
        p = jnp.exp(pe)
        denom = jnp.sum(p, axis=-1, keepdims=True, dtype=f32)  # (n_head, tq, 1)

        # Unnormalized PV matmul; normalize the small (n_head, tq, H) output
        # with the EUP reciprocal instead of dividing the (tq, T) probabilities.
        ctx = jnp.einsum('nqk,nkh->nqh', p.astype(cdt), vb,
                         preferred_element_type=f32)          # (n_head, tq, H)
        ctx = ctx * pl.reciprocal(denom, approx=use_bf16)

        merged = jnp.concatenate([ctx[h] for h in range(n_head)], axis=-1)
        sa_scr[i] = merged.astype(cdt)                        # (tile_q, C)

    sa = jnp.dot(sa_scr[...].reshape(T, C), wproj_ref[...],
                 preferred_element_type=f32) + bproj
    x1 = x + sa

    # ---- 2) feed-forward MLP on ln2(x1), chunked over the 4C hidden dim ----
    xn2c = _layernorm(x1, g2, be2).astype(cdt)
    ff_scr[...] = jnp.zeros_like(ff_scr)

    @pl.loop(0, n_mlp)
    def _mlp_chunk(j):
        h1 = jnp.dot(xn2c, w1_ref[j], preferred_element_type=f32) + b1_ref[j]
        h1 = jnp.maximum(h1, 0.0)                             # ReLU
        ff_scr[...] += jnp.dot(h1.astype(cdt), w2_ref[j],
                               preferred_element_type=f32)

    o_ref[0] = (x1 + ff_scr[...] + b2).astype(o_ref.dtype)


def _largest_divisor_leq(n, cap):
    cap = max(1, min(cap, n))
    for d in range(cap, 0, -1):
        if n % d == 0:
            return d
    return 1


def _const_spec(shape):
    """BlockSpec for an operand whose block never changes across the grid.
    Single-buffer it (Buffered(1)) so resident weights aren't double-buffered."""
    index_map = lambda b, _shape=shape: (0,) * len(_shape)
    if hasattr(pl, "Buffered"):
        try:
            return pl.BlockSpec(shape, index_map, pipeline_mode=pl.Buffered(1))
        except TypeError:
            pass
    return pl.BlockSpec(shape, index_map)


def _vmem_capacity_bytes():
    try:
        cap = getattr(pltpu.get_tpu_info(), "vmem_capacity_bytes", None)
        if cap:
            return int(cap)
    except Exception:
        pass
    return 64 * 1024 * 1024   # conservative fallback (v7x per-TensorCore)


def prepare_params(params, n_head, *, compute_dtype=jnp.bfloat16, mlp_chunk=2048):
    """One-time parameter prep (hoisted out of the per-call path):
    - fuse QKV into one (C, 3C) weight, fold 1/sqrt(H) into the Q columns,
    - cast matmul weights to the compute dtype (biases/LN params stay f32),
    - pre-split MLP weights into hidden-dim chunks indexed on a leading axis."""
    cdt = jnp.dtype(compute_dtype)
    C = params["wq"].shape[0]
    H = C // n_head
    hid = params["w1"].shape[1]
    chunk = _largest_divisor_leq(hid, mlp_chunk)
    n_mlp = hid // chunk
    scale = float(H) ** -0.5

    wqkv = jnp.concatenate(
        [params["wq"] * scale, params["wk"], params["wv"]], axis=1)
    f32 = jnp.float32
    return {
        "_prepared": True,
        "_compute_dtype": cdt,
        "_mlp_chunk": chunk,
        "wqkv": wqkv.astype(cdt),
        "wproj": params["wproj"].astype(cdt),
        "bproj": params["bproj"].astype(f32),
        "w1": params["w1"].reshape(C, n_mlp, chunk).transpose(1, 0, 2).astype(cdt),
        "b1": params["b1"].reshape(1, n_mlp, chunk).transpose(1, 0, 2).astype(f32),
        "w2": params["w2"].reshape(n_mlp, chunk, C).astype(cdt),
        "b2": params["b2"].astype(f32),
        "g1": params["g1"].astype(f32),
        "be1": params["be1"].astype(f32),
        "g2": params["g2"].astype(f32),
        "be2": params["be2"].astype(f32),
    }


def transformer_block(x, params, n_head, *, compute_dtype=jnp.bfloat16,
                      tile_q=256, mlp_chunk=2048):
    """x: (B, T, C) float32. Returns (B, T, C).
    compute_dtype: matmul operand dtype (bf16 default; f32 for exact parity)."""
    B, T, C = x.shape
    assert C % n_head == 0, "n_embed must be divisible by n_head"

    if not params.get("_prepared", False):
        params = prepare_params(params, n_head, compute_dtype=compute_dtype,
                                mlp_chunk=mlp_chunk)
    cdt = params["_compute_dtype"]
    chunk = params["_mlp_chunk"]
    n_mlp = params["w1"].shape[0]
    hid = n_mlp * chunk

    tq = _largest_divisor_leq(T, tile_q)
    nq = T // tq

    kernel = functools.partial(
        block_kernel, n_head=n_head, tile_q=tq, compute_dtype=cdt)

    # VMEM budget: single-buffered weights (Buffered(1)), double-buffered x/out,
    # scratch, and the per-q-tile / per-MLP-chunk live set.  Clamped per
    # generation from the queried VMEM capacity.
    cds = cdt.itemsize
    wbytes = (3 * C * C + C * C + 2 * hid * C) * cds + (6 * C + hid) * 4
    io = 2 * 2 * T * C * 4
    scratch = T * C * (2 * cds + 4)
    live = (9 * T * C) * 4 + 2 * T * C * cds \
        + 2 * n_head * tq * T * 4 + T * chunk * (4 + cds)
    cap = _vmem_capacity_bytes()
    vmem_budget = int(min(max(wbytes + io + scratch + live + (4 << 20), 32 << 20),
                          int(cap * 0.9)))

    return pl.pallas_call(
        kernel,
        out_shape=jax.ShapeDtypeStruct((B, T, C), x.dtype),
        grid_spec=pltpu.PrefetchScalarGridSpec(
            num_scalar_prefetch=0,
            grid=(B,),
            in_specs=[
                pl.BlockSpec((1, T, C), lambda b: (b, 0, 0)),   # x
                _const_spec((C, 3 * C)),                        # wqkv (fused)
                _const_spec((C, C)),                            # wproj
                _const_spec((1, C)),                            # bproj
                _const_spec((n_mlp, C, chunk)),                 # w1 chunks
                _const_spec((n_mlp, 1, chunk)),                 # b1 chunks
                _const_spec((n_mlp, chunk, C)),                 # w2 chunks
                _const_spec((1, C)),                            # b2
                _const_spec((1, C)),                            # ln1 gamma
                _const_spec((1, C)),                            # ln1 beta
                _const_spec((1, C)),                            # ln2 gamma
                _const_spec((1, C)),                            # ln2 beta
            ],
            out_specs=pl.BlockSpec((1, T, C), lambda b: (b, 0, 0)),
            scratch_shapes=[
                pltpu.VMEM((nq, tq, C), cdt),          # staged Q tiles
                pltpu.VMEM((nq, tq, C), cdt),          # per-tile attention out
                pltpu.VMEM((T, C), jnp.float32),       # MLP accumulator
            ],
        ),
        compiler_params=pltpu.CompilerParams(
            dimension_semantics=("parallel",),   # B>=2 -> both v7x TensorCores
            vmem_limit_bytes=vmem_budget,
        ),
    )(
        x,
        params["wqkv"], params["wproj"], params["bproj"],
        params["w1"], params["b1"], params["w2"], params["b2"],
        params["g1"], params["be1"], params["g2"], params["be2"],
    )


def init_params(key, n_embed, n_head):
    C = n_embed
    keys = jax.random.split(key, 10)
    scale = 0.02
    return {
        "wq": scale * jax.random.normal(keys[0], (C, C), jnp.float32),
        "wk": scale * jax.random.normal(keys[1], (C, C), jnp.float32),
        "wv": scale * jax.random.normal(keys[2], (C, C), jnp.float32),
        "wproj": scale * jax.random.normal(keys[3], (C, C), jnp.float32),
        "bproj": scale * jax.random.normal(keys[4], (1, C), jnp.float32),
        "w1": scale * jax.random.normal(keys[5], (C, 4 * C), jnp.float32),
        "b1": scale * jax.random.normal(keys[6], (1, 4 * C), jnp.float32),
        "w2": scale * jax.random.normal(keys[7], (4 * C, C), jnp.float32),
        "b2": scale * jax.random.normal(keys[8], (1, C), jnp.float32),
        "g1": jnp.ones((1, C), jnp.float32),
        "be1": jnp.zeros((1, C), jnp.float32),
        "g2": jnp.ones((1, C), jnp.float32),
        "be2": jnp.zeros((1, C), jnp.float32),
    }


def reference_block(x, p, n_head):
    """Pure-JAX reference mirroring the PyTorch forward (eval mode)."""
    B, T, C = x.shape
    H = C // n_head

    def ln(z, g, b, eps=1e-5):
        m = jnp.mean(z, -1, keepdims=True)
        v = jnp.mean((z - m) ** 2, -1, keepdims=True)
        return (z - m) / jnp.sqrt(v + eps) * g + b

    xn1 = ln(x, p["g1"], p["be1"])
    q = xn1 @ p["wq"]; k = xn1 @ p["wk"]; v = xn1 @ p["wv"]
    q = q.reshape(B, T, n_head, H).transpose(0, 2, 1, 3)
    k = k.reshape(B, T, n_head, H).transpose(0, 2, 1, 3)
    v = v.reshape(B, T, n_head, H).transpose(0, 2, 1, 3)
    aff = jnp.einsum("bhqd,bhkd->bhqk", q, k) * (H ** -0.5)
    mask = jnp.tril(jnp.ones((T, T), bool))
    aff = jnp.where(mask, aff, -jnp.inf)
    aff = jax.nn.softmax(aff, -1)
    sa = jnp.einsum("bhqk,bhkd->bhqd", aff, v).transpose(0, 2, 1, 3).reshape(B, T, C)
    sa = sa @ p["wproj"] + p["bproj"]
    x1 = x + sa
    xn2 = ln(x1, p["g2"], p["be2"])
    ff = jnp.maximum(xn2 @ p["w1"] + p["b1"], 0.0) @ p["w2"] + p["b2"]
    return x1 + ff


if __name__ == "__main__":
    key = jax.random.PRNGKey(0)
    kx, kp, kx2, kp2 = jax.random.split(key, 4)

    # --- small shapes consistent with the module (block_size=T=8, head_size=8) ---
    B, T, C, n_head = 2, 8, 32, 4
    x = jax.random.normal(kx, (B, T, C), jnp.float32)
    params = init_params(kp, C, n_head)
    ref = reference_block(x, params, n_head)

    # Exact-parity path (f32 operands); params prepared once (hoisted prep).
    p_f32 = prepare_params(params, n_head, compute_dtype=jnp.float32)
    out = jax.block_until_ready(transformer_block(x, p_f32, n_head))
    assert out.shape == (B, T, C)
    assert jnp.allclose(out, ref, atol=1e-4, rtol=1e-4), "f32 mismatch vs reference"

    # Mixed-precision fast path (bf16 operands, f32 accumulation) — the default.
    p_bf16 = prepare_params(params, n_head, compute_dtype=jnp.bfloat16)
    out_bf16 = jax.block_until_ready(transformer_block(x, p_bf16, n_head))
    assert jnp.allclose(out_bf16, ref, atol=5e-2, rtol=5e-2), "bf16 mismatch vs reference"

    # --- slightly larger config exercising the q-tile loop and MLP chunking ---
    B2, T2, C2, n_head2 = 1, 256, 128, 4
    x2 = jax.random.normal(kx2, (B2, T2, C2), jnp.float32)
    params2 = init_params(kp2, C2, n_head2)
    ref2 = reference_block(x2, params2, n_head2)
    p2 = prepare_params(params2, n_head2, compute_dtype=jnp.float32, mlp_chunk=256)
    out2 = jax.block_until_ready(
        transformer_block(x2, p2, n_head2, tile_q=128))   # nq=2, n_mlp=2
    assert jnp.allclose(out2, ref2, atol=3e-2, rtol=3e-2), "tiled f32 mismatch vs reference"

    print("KERNEL_OK")
</pallas_src>

<mosaic_0001>
module attributes {stable_mosaic.version = 11 : i64} {
  func.func @block_kernel(%arg0: i32, %arg1: memref<1x8x32xf32, #tpu.memory_space<vmem>>, %arg2: memref<32x96xf32, #tpu.memory_space<vmem>>, %arg3: memref<32x32xf32, #tpu.memory_space<vmem>>, %arg4: memref<1x32xf32, #tpu.memory_space<vmem>>, %arg5: memref<1x32x128xf32, #tpu.memory_space<vmem>>, %arg6: memref<1x1x128xf32, #tpu.memory_space<vmem>>, %arg7: memref<1x128x32xf32, #tpu.memory_space<vmem>>, %arg8: memref<1x32xf32, #tpu.memory_space<vmem>>, %arg9: memref<1x32xf32, #tpu.memory_space<vmem>>, %arg10: memref<1x32xf32, #tpu.memory_space<vmem>>, %arg11: memref<1x32xf32, #tpu.memory_space<vmem>>, %arg12: memref<1x32xf32, #tpu.memory_space<vmem>>, %arg13: memref<1x8x32xf32, #tpu.memory_space<vmem>>, %arg14: memref<1x8x32xf32, #tpu.memory_space<vmem>>, %arg15: memref<1x8x32xf32, #tpu.memory_space<vmem>>, %arg16: memref<8x32xf32, #tpu.memory_space<vmem>>) attributes {dimension_semantics = [#tpu.dimension_semantics<parallel>], iteration_bounds = array<i64: 2>, scalar_prefetch = 0 : i64, scratch_operands = 3 : i64, tpu.core_type = #tpu.core_type<tc>, window_params = [{transform_indices = @transform_0, window_bounds = array<i64: 1, 8, 32>}, {pipeline_mode = #tpu.pipeline_mode<synchronous>, transform_indices = @transform_1, window_bounds = array<i64: 32, 96>}, {pipeline_mode = #tpu.pipeline_mode<synchronous>, transform_indices = @transform_2, window_bounds = array<i64: 32, 32>}, {pipeline_mode = #tpu.pipeline_mode<synchronous>, transform_indices = @transform_3, window_bounds = array<i64: 1, 32>}, {pipeline_mode = #tpu.pipeline_mode<synchronous>, transform_indices = @transform_4, window_bounds = array<i64: 1, 32, 128>}, {pipeline_mode = #tpu.pipeline_mode<synchronous>, transform_indices = @transform_5, window_bounds = array<i64: 1, 1, 128>}, {pipeline_mode = #tpu.pipeline_mode<synchronous>, transform_indices = @transform_6, window_bounds = array<i64: 1, 128, 32>}, {pipeline_mode = #tpu.pipeline_mode<synchronous>, transform_indices = @transform_7, window_bounds = array<i64: 1, 32>}, {pipeline_mode = #tpu.pipeline_mode<synchronous>, transform_indices = @transform_8, window_bounds = array<i64: 1, 32>}, {pipeline_mode = #tpu.pipeline_mode<synchronous>, transform_indices = @transform_9, window_bounds = array<i64: 1, 32>}, {pipeline_mode = #tpu.pipeline_mode<synchronous>, transform_indices = @transform_10, window_bounds = array<i64: 1, 32>}, {pipeline_mode = #tpu.pipeline_mode<synchronous>, transform_indices = @transform_11, window_bounds = array<i64: 1, 32>}, {transform_indices = @transform_12, window_bounds = array<i64: 1, 8, 32>}]} {
    %c0 = arith.constant 0 : index
    %c0_0 = arith.constant 0 : index
    %c0_1 = arith.constant 0 : index
    %0 = vector.load %arg1[%c0, %c0_0, %c0_1] : memref<1x8x32xf32, #tpu.memory_space<vmem>>, vector<1x8x32xf32>
    %1 = vector.shape_cast %0 : vector<1x8x32xf32> to vector<8x32xf32>
    %c0_2 = arith.constant 0 : index
    %c0_3 = arith.constant 0 : index
    %2 = vector.load %arg9[%c0_2, %c0_3] : memref<1x32xf32, #tpu.memory_space<vmem>>, vector<1x32xf32>
    %c0_4 = arith.constant 0 : index
    %c0_5 = arith.constant 0 : index
    %3 = vector.load %arg10[%c0_4, %c0_5] : memref<1x32xf32, #tpu.memory_space<vmem>>, vector<1x32xf32>
    %c0_6 = arith.constant 0 : index
    %c0_7 = arith.constant 0 : index
    %4 = vector.load %arg11[%c0_6, %c0_7] : memref<1x32xf32, #tpu.memory_space<vmem>>, vector<1x32xf32>
    %c0_8 = arith.constant 0 : index
    %c0_9 = arith.constant 0 : index
    %5 = vector.load %arg12[%c0_8, %c0_9] : memref<1x32xf32, #tpu.memory_space<vmem>>, vector<1x32xf32>
    %c0_10 = arith.constant 0 : index
    %c0_11 = arith.constant 0 : index
    %6 = vector.load %arg4[%c0_10, %c0_11] : memref<1x32xf32, #tpu.memory_space<vmem>>, vector<1x32xf32>
    %c0_12 = arith.constant 0 : index
    %c0_13 = arith.constant 0 : index
    %7 = vector.load %arg8[%c0_12, %c0_13] : memref<1x32xf32, #tpu.memory_space<vmem>>, vector<1x32xf32>
    %cst = arith.constant dense<0.000000e+00> : vector<8xf32>
    %8 = vector.multi_reduction <add>, %1, %cst [1] : vector<8x32xf32> to vector<8xf32>
    %9 = vector.shape_cast %8 : vector<8xf32> to vector<8x1xf32>
    %cst_14 = arith.constant 3.200000e+01 : f32
    %10 = vector.broadcast %cst_14 : f32 to vector<8x1xf32>
    %11 = arith.divf %9, %10 : vector<8x1xf32>
    %12 = vector.broadcast %11 : vector<8x1xf32> to vector<8x32xf32>
    %13 = arith.subf %1, %12 : vector<8x32xf32>
    %14 = arith.mulf %13, %13 : vector<8x32xf32>
    %cst_15 = arith.constant dense<0.000000e+00> : vector<8xf32>
    %15 = vector.multi_reduction <add>, %14, %cst_15 [1] : vector<8x32xf32> to vector<8xf32>
    %16 = vector.shape_cast %15 : vector<8xf32> to vector<8x1xf32>
    %cst_16 = arith.constant 3.200000e+01 : f32
    %17 = vector.broadcast %cst_16 : f32 to vector<8x1xf32>
    %18 = arith.divf %16, %17 : vector<8x1xf32>
    %19 = vector.broadcast %11 : vector<8x1xf32> to vector<8x32xf32>
    %20 = arith.subf %1, %19 : vector<8x32xf32>
    %cst_17 = arith.constant 9.99999974E-6 : f32
    %21 = vector.broadcast %cst_17 : f32 to vector<8x1xf32>
    %22 = arith.addf %18, %21 : vector<8x1xf32>
    %23 = math.rsqrt %22 : vector<8x1xf32>
    %24 = vector.broadcast %23 : vector<8x1xf32> to vector<8x32xf32>
    %25 = arith.mulf %20, %24 : vector<8x32xf32>
    %26 = vector.broadcast %2 : vector<1x32xf32> to vector<8x32xf32>
    %27 = arith.mulf %25, %26 : vector<8x32xf32>
    %28 = vector.broadcast %3 : vector<1x32xf32> to vector<8x32xf32>
    %29 = arith.addf %27, %28 : vector<8x32xf32>
    %c0_18 = arith.constant 0 : index
    %c0_19 = arith.constant 0 : index
    %30 = vector.load %arg2[%c0_18, %c0_19] : memref<32x96xf32, #tpu.memory_space<vmem>>, vector<32x96xf32>
    %cst_20 = arith.constant dense<0.000000e+00> : vector<8x96xf32>
    %31 = tpu.matmul %29, %30, %cst_20 {dimension_numbers = #tpu.dot_dimension_numbers<[1], [0], [0], [1], [0, 0, 1, 1], [], []>} : vector<8x32xf32>, vector<32x96xf32>, vector<8x96xf32> -> vector<8x96xf32>
    %32 = vector.extract_strided_slice %31 {offsets = [0, 0], sizes = [8, 32], strides = [1, 1]} : vector<8x96xf32> to vector<8x32xf32>
    %33 = vector.extract_strided_slice %31 {offsets = [0, 32], sizes = [8, 32], strides = [1, 1]} : vector<8x96xf32> to vector<8x32xf32>
    %34 = vector.extract_strided_slice %31 {offsets = [0, 64], sizes = [8, 32], strides = [1, 1]} : vector<8x96xf32> to vector<8x32xf32>
    %35 = vector.extract_strided_slice %33 {offsets = [0, 0], sizes = [8, 8], strides = [1, 1]} : vector<8x32xf32> to vector<8x8xf32>
    %36 = vector.extract_strided_slice %33 {offsets = [0, 8], sizes = [8, 8], strides = [1, 1]} : vector<8x32xf32> to vector<8x8xf32>
    %37 = vector.extract_strided_slice %33 {offsets = [0, 16], sizes = [8, 8], strides = [1, 1]} : vector<8x32xf32> to vector<8x8xf32>
    %38 = vector.extract_strided_slice %33 {offsets = [0, 24], sizes = [8, 8], strides = [1, 1]} : vector<8x32xf32> to vector<8x8xf32>
    %39 = vector.shape_cast %35 : vector<8x8xf32> to vector<1x8x8xf32>
    %40 = vector.shape_cast %36 : vector<8x8xf32> to vector<1x8x8xf32>
    %41 = vector.shape_cast %37 : vector<8x8xf32> to vector<1x8x8xf32>
    %42 = vector.shape_cast %38 : vector<8x8xf32> to vector<1x8x8xf32>
    %43 = tpu.concatenate %39, %40, %41, %42 in 0 : vector<1x8x8xf32>, vector<1x8x8xf32>, vector<1x8x8xf32>, vector<1x8x8xf32> -> vector<4x8x8xf32>
    %44 = vector.extract_strided_slice %34 {offsets = [0, 0], sizes = [8, 8], strides = [1, 1]} : vector<8x32xf32> to vector<8x8xf32>
    %45 = vector.extract_strided_slice %34 {offsets = [0, 8], sizes = [8, 8], strides = [1, 1]} : vector<8x32xf32> to vector<8x8xf32>
    %46 = vector.extract_strided_slice %34 {offsets = [0, 16], sizes = [8, 8], strides = [1, 1]} : vector<8x32xf32> to vector<8x8xf32>
    %47 = vector.extract_strided_slice %34 {offsets = [0, 24], sizes = [8, 8], strides = [1, 1]} : vector<8x32xf32> to vector<8x8xf32>
    %48 = vector.shape_cast %44 : vector<8x8xf32> to vector<1x8x8xf32>
    %49 = vector.shape_cast %45 : vector<8x8xf32> to vector<1x8x8xf32>
    %50 = vector.shape_cast %46 : vector<8x8xf32> to vector<1x8x8xf32>
    %51 = vector.shape_cast %47 : vector<8x8xf32> to vector<1x8x8xf32>
    %52 = tpu.concatenate %48, %49, %50, %51 in 0 : vector<1x8x8xf32>, vector<1x8x8xf32>, vector<1x8x8xf32>, vector<1x8x8xf32> -> vector<4x8x8xf32>
    %53 = vector.shape_cast %32 : vector<8x32xf32> to vector<1x8x32xf32>
    %c0_21 = arith.constant 0 : index
    %c0_22 = arith.constant 0 : index
    %c0_23 = arith.constant 0 : index
    %54 = vector.load %arg14[%c0_21, %c0_22, %c0_23] : memref<1x8x32xf32, #tpu.memory_space<vmem>>, vector<1x8x32xf32>
    tpu.vector_store %arg14[%c0_21, %c0_22, %c0_23], %53 {strides = array<i32>} : memref<1x8x32xf32, #tpu.memory_space<vmem>>, vector<1x8x32xf32>,
    %55 = tpu.iota {dimensions = array<i32: 0>} : vector<8x8xi32>
    %56 = tpu.iota {dimensions = array<i32: 1>} : vector<8x8xi32>
    %c0_i32 = arith.constant 0 : i32
    %c1_i32 = arith.constant 1 : i32
    %57 = arith.muli %c0_i32, %c1_i32 : i32
    %c0_i32_24 = arith.constant 0 : i32
    %58 = arith.addi %c0_i32_24, %57 : i32
    %59 = arith.index_cast %58 : i32 to index
    %c0_25 = arith.constant 0 : index
    %c0_26 = arith.constant 0 : index
    %60 = vector.load %arg14[%59, %c0_25, %c0_26] : memref<1x8x32xf32, #tpu.memory_space<vmem>>, vector<1x8x32xf32>
    %61 = vector.shape_cast %60 : vector<1x8x32xf32> to vector<8x32xf32>
    %62 = vector.extract_strided_slice %61 {offsets = [0, 0], sizes = [8, 8], strides = [1, 1]} : vector<8x32xf32> to vector<8x8xf32>
    %63 = vector.extract_strided_slice %61 {offsets = [0, 8], sizes = [8, 8], strides = [1, 1]} : vector<8x32xf32> to vector<8x8xf32>
    %64 = vector.extract_strided_slice %61 {offsets = [0, 16], sizes = [8, 8], strides = [1, 1]} : vector<8x32xf32> to vector<8x8xf32>
    %65 = vector.extract_strided_slice %61 {offsets = [0, 24], sizes = [8, 8], strides = [1, 1]} : vector<8x32xf32> to vector<8x8xf32>
    %66 = vector.shape_cast %62 : vector<8x8xf32> to vector<1x8x8xf32>
    %67 = vector.shape_cast %63 : vector<8x8xf32> to vector<1x8x8xf32>
    %68 = vector.shape_cast %64 : vector<8x8xf32> to vector<1x8x8xf32>
    %69 = vector.shape_cast %65 : vector<8x8xf32> to vector<1x8x8xf32>
    %70 = tpu.concatenate %66, %67, %68, %69 in 0 : vector<1x8x8xf32>, vector<1x8x8xf32>, vector<1x8x8xf32>, vector<1x8x8xf32> -> vector<4x8x8xf32>
    "tpu.trace_start"() <{level = 10 : i32, message = "nqh,nkh->nqk"}> : () -> ()
    %cst_27 = arith.constant dense<0.000000e+00> : vector<4x8x8xf32>
    %71 = tpu.matmul %70, %43, %cst_27 {dimension_numbers = #tpu.dot_dimension_numbers<[2], [2], [1], [1], [0, 0, 0, 1, 1, 1], [0], [0]>} : vector<4x8x8xf32>, vector<4x8x8xf32>, vector<4x8x8xf32> -> vector<4x8x8xf32>
    "tpu.trace_stop"() : () -> ()
    %c8_i32 = arith.constant 8 : i32
    %72 = arith.muli %58, %c8_i32 : i32
    %73 = vector.broadcast %72 : i32 to vector<8x8xi32>
    %74 = arith.addi %55, %73 : vector<8x8xi32>
    %75 = arith.cmpi sge, %74, %56 : vector<8x8xi32>
    %cst_28 = arith.constant 0.000000e+00 : f32
    %cst_29 = arith.constant -1.000000e+30 : f32
    %76 = vector.broadcast %cst_28 : f32 to vector<8x8xf32>
    %77 = vector.broadcast %cst_29 : f32 to vector<8x8xf32>
    %78 = arith.select %75, %76, %77 : vector<8x8xi1>, vector<8x8xf32>
    %79 = vector.shape_cast %78 : vector<8x8xf32> to vector<1x8x8xf32>
    %80 = vector.broadcast %79 : vector<1x8x8xf32> to vector<4x8x8xf32>
    %81 = arith.addf %71, %80 : vector<4x8x8xf32>
    %cst_30 = arith.constant dense<0xFF800000> : vector<4x8xf32>
    %82 = vector.multi_reduction <maximumf>, %81, %cst_30 [2] : vector<4x8x8xf32> to vector<4x8xf32>
    %83 = vector.shape_cast %82 : vector<4x8xf32> to vector<4x8x1xf32>
    %84 = vector.broadcast %83 : vector<4x8x1xf32> to vector<4x8x8xf32>
    %85 = arith.subf %81, %84 : vector<4x8x8xf32>
    %86 = math.exp %85 : vector<4x8x8xf32>
    %cst_31 = arith.constant dense<0.000000e+00> : vector<4x8xf32>
    %87 = vector.multi_reduction <add>, %86, %cst_31 [2] : vector<4x8x8xf32> to vector<4x8xf32>
    %88 = vector.shape_cast %87 : vector<4x8xf32> to vector<4x8x1xf32>
    "tpu.trace_start"() <{level = 10 : i32, message = "nqk,nkh->nqh"}> : () -> ()
    %cst_32 = arith.constant dense<0.000000e+00> : vector<4x8x8xf32>
    %89 = tpu.matmul %86, %52, %cst_32 {dimension_numbers = #tpu.dot_dimension_numbers<[2], [1], [1], [2], [0, 0, 0, 1, 1, 2], [0], [0]>} : vector<4x8x8xf32>, vector<4x8x8xf32>, vector<4x8x8xf32> -> vector<4x8x8xf32>
    "tpu.trace_stop"() : () -> ()
    %90 = tpu.reciprocal %88 : vector<4x8x1xf32> -> vector<4x8x1xf32>
    %91 = vector.broadcast %90 : vector<4x8x1xf32> to vector<4x8x8xf32>
    %92 = arith.mulf %89, %91 : vector<4x8x8xf32>
    %93 = vector.extract_strided_slice %92 {offsets = [0, 0, 0], sizes = [1, 8, 8], strides = [1, 1, 1]} : vector<4x8x8xf32> to vector<1x8x8xf32>
    %94 = vector.shape_cast %93 : vector<1x8x8xf32> to vector<8x8xf32>
    %95 = vector.extract_strided_slice %92 {offsets = [1, 0, 0], sizes = [1, 8, 8], strides = [1, 1, 1]} : vector<4x8x8xf32> to vector<1x8x8xf32>
    %96 = vector.shape_cast %95 : vector<1x8x8xf32> to vector<8x8xf32>
    %97 = vector.extract_strided_slice %92 {offsets = [2, 0, 0], sizes = [1, 8, 8], strides = [1, 1, 1]} : vector<4x8x8xf32> to vector<1x8x8xf32>
    %98 = vector.shape_cast %97 : vector<1x8x8xf32> to vector<8x8xf32>
    %99 = vector.extract_strided_slice %92 {offsets = [3, 0, 0], sizes = [1, 8, 8], strides = [1, 1, 1]} : vector<4x8x8xf32> to vector<1x8x8xf32>
    %100 = vector.shape_cast %99 : vector<1x8x8xf32> to vector<8x8xf32>
    %101 = tpu.concatenate %94, %96, %98, %100 in 1 : vector<8x8xf32>, vector<8x8xf32>, vector<8x8xf32>, vector<8x8xf32> -> vector<8x32xf32>
    %102 = arith.index_cast %58 : i32 to index
    %c0_33 = arith.constant 0 : index
    %c0_34 = arith.constant 0 : index
    %103 = vector.load %arg15[%102, %c0_33, %c0_34] : memref<1x8x32xf32, #tpu.memory_space<vmem>>, vector<1x8x32xf32>
    %104 = vector.shape_cast %103 : vector<1x8x32xf32> to vector<8x32xf32>
    %105 = vector.shape_cast %101 : vector<8x32xf32> to vector<1x8x32xf32>
    tpu.vector_store %arg15[%102, %c0_33, %c0_34], %105 {strides = array<i32>} : memref<1x8x32xf32, #tpu.memory_space<vmem>>, vector<1x8x32xf32>,
    %c1_i32_35 = arith.constant 1 : i32
    %c0_36 = arith.constant 0 : index
    %c0_37 = arith.constant 0 : index
    %c0_38 = arith.constant 0 : index
    %106 = vector.load %arg15[%c0_36, %c0_37, %c0_38] : memref<1x8x32xf32, #tpu.memory_space<vmem>>, vector<1x8x32xf32>
    %107 = vector.shape_cast %106 : vector<1x8x32xf32> to vector<8x32xf32>
    %c0_39 = arith.constant 0 : index
    %c0_40 = arith.constant 0 : index
    %108 = vector.load %arg3[%c0_39, %c0_40] : memref<32x32xf32, #tpu.memory_space<vmem>>, vector<32x32xf32>
    %cst_41 = arith.constant dense<0.000000e+00> : vector<8x32xf32>
    %109 = tpu.matmul %107, %108, %cst_41 {dimension_numbers = #tpu.dot_dimension_numbers<[1], [0], [0], [1], [0, 0, 1, 1], [], []>} : vector<8x32xf32>, vector<32x32xf32>, vector<8x32xf32> -> vector<8x32xf32>
    %110 = vector.broadcast %6 : vector<1x32xf32> to vector<8x32xf32>
    %111 = arith.addf %109, %110 : vector<8x32xf32>
    %112 = arith.addf %1, %111 : vector<8x32xf32>
    %cst_42 = arith.constant dense<0.000000e+00> : vector<8xf32>
    %113 = vector.multi_reduction <add>, %112, %cst_42 [1] : vector<8x32xf32> to vector<8xf32>
    %114 = vector.shape_cast %113 : vector<8xf32> to vector<8x1xf32>
    %cst_43 = arith.constant 3.200000e+01 : f32
    %115 = vector.broadcast %cst_43 : f32 to vector<8x1xf32>
    %116 = arith.divf %114, %115 : vector<8x1xf32>
    %117 = vector.broadcast %116 : vector<8x1xf32> to vector<8x32xf32>
    %118 = arith.subf %112, %117 : vector<8x32xf32>
    %119 = arith.mulf %118, %118 : vector<8x32xf32>
    %cst_44 = arith.constant dense<0.000000e+00> : vector<8xf32>
    %120 = vector.multi_reduction <add>, %119, %cst_44 [1] : vector<8x32xf32> to vector<8xf32>
    %121 = vector.shape_cast %120 : vector<8xf32> to vector<8x1xf32>
    %cst_45 = arith.constant 3.200000e+01 : f32
    %122 = vector.broadcast %cst_45 : f32 to vector<8x1xf32>
    %123 = arith.divf %121, %122 : vector<8x1xf32>
    %124 = vector.broadcast %116 : vector<8x1xf32> to vector<8x32xf32>
    %125 = arith.subf %112, %124 : vector<8x32xf32>
    %cst_46 = arith.constant 9.99999974E-6 : f32
    %126 = vector.broadcast %cst_46 : f32 to vector<8x1xf32>
    %127 = arith.addf %123, %126 : vector<8x1xf32>
    %128 = math.rsqrt %127 : vector<8x1xf32>
    %129 = vector.broadcast %128 : vector<8x1xf32> to vector<8x32xf32>
    %130 = arith.mulf %125, %129 : vector<8x32xf32>
    %131 = vector.broadcast %4 : vector<1x32xf32> to vector<8x32xf32>
    %132 = arith.mulf %130, %131 : vector<8x32xf32>
    %133 = vector.broadcast %5 : vector<1x32xf32> to vector<8x32xf32>
    %134 = arith.addf %132, %133 : vector<8x32xf32>
    %cst_47 = arith.constant 0.000000e+00 : f32
    %135 = vector.broadcast %cst_47 : f32 to vector<8x32xf32>
    %c0_48 = arith.constant 0 : index
    %c0_49 = arith.constant 0 : index
    %136 = vector.load %arg16[%c0_48, %c0_49] : memref<8x32xf32, #tpu.memory_space<vmem>>, vector<8x32xf32>
    tpu.vector_store %arg16[%c0_48, %c0_49], %135 {strides = array<i32>} : memref<8x32xf32, #tpu.memory_space<vmem>>, vector<8x32xf32>,
    %c0_i32_50 = arith.constant 0 : i32
    %c1_i32_51 = arith.constant 1 : i32
    %137 = arith.muli %c0_i32_50, %c1_i32_51 : i32
    %c0_i32_52 = arith.constant 0 : i32
    %138 = arith.addi %c0_i32_52, %137 : i32
    %139 = arith.index_cast %138 : i32 to index
    %c0_53 = arith.constant 0 : index
    %c0_54 = arith.constant 0 : index
    %140 = vector.load %arg5[%139, %c0_53, %c0_54] : memref<1x32x128xf32, #tpu.memory_space<vmem>>, vector<1x32x128xf32>
    %141 = vector.shape_cast %140 : vector<1x32x128xf32> to vector<32x128xf32>
    %cst_55 = arith.constant dense<0.000000e+00> : vector<8x128xf32>
    %142 = tpu.matmul %134, %141, %cst_55 {dimension_numbers = #tpu.dot_dimension_numbers<[1], [0], [0], [1], [0, 0, 1, 1], [], []>} : vector<8x32xf32>, vector<32x128xf32>, vector<8x128xf32> -> vector<8x128xf32>
    %143 = arith.index_cast %138 : i32 to index
    %c0_56 = arith.constant 0 : index
    %c0_57 = arith.constant 0 : index
    %144 = vector.load %arg6[%143, %c0_56, %c0_57] : memref<1x1x128xf32, #tpu.memory_space<vmem>>, vector<1x1x128xf32>
    %145 = vector.shape_cast %144 : vector<1x1x128xf32> to vector<1x128xf32>
    %146 = vector.broadcast %145 : vector<1x128xf32> to vector<8x128xf32>
    %147 = arith.addf %142, %146 : vector<8x128xf32>
    %cst_58 = arith.constant 0.000000e+00 : f32
    %148 = vector.broadcast %cst_58 : f32 to vector<8x128xf32>
    %149 = arith.maximumf %147, %148 : vector<8x128xf32>
    %c0_59 = arith.constant 0 : index
    %c0_60 = arith.constant 0 : index
    %150 = vector.load %arg16[%c0_59, %c0_60] : memref<8x32xf32, #tpu.memory_space<vmem>>, vector<8x32xf32>
    %151 = arith.index_cast %138 : i32 to index
    %c0_61 = arith.constant 0 : index
    %c0_62 = arith.constant 0 : index
    %152 = vector.load %arg7[%151, %c0_61, %c0_62] : memref<1x128x32xf32, #tpu.memory_space<vmem>>, vector<1x128x32xf32>
    %153 = vector.shape_cast %152 : vector<1x128x32xf32> to vector<128x32xf32>
    %cst_63 = arith.constant dense<0.000000e+00> : vector<8x32xf32>
    %154 = tpu.matmul %149, %153, %cst_63 {dimension_numbers = #tpu.dot_dimension_numbers<[1], [0], [0], [1], [0, 0, 1, 1], [], []>} : vector<8x128xf32>, vector<128x32xf32>, vector<8x32xf32> -> vector<8x32xf32>
    %155 = arith.addf %150, %154 : vector<8x32xf32>
    %c0_64 = arith.constant 0 : index
    %c0_65 = arith.constant 0 : index
    %156 = vector.load %arg16[%c0_64, %c0_65] : memref<8x32xf32, #tpu.memory_space<vmem>>, vector<8x32xf32>
    tpu.vector_store %arg16[%c0_64, %c0_65], %155 {strides = array<i32>} : memref<8x32xf32, #tpu.memory_space<vmem>>, vector<8x32xf32>,
    %c1_i32_66 = arith.constant 1 : i32
    %c0_67 = arith.constant 0 : index
    %c0_68 = arith.constant 0 : index
    %157 = vector.load %arg16[%c0_67, %c0_68] : memref<8x32xf32, #tpu.memory_space<vmem>>, vector<8x32xf32>
    %158 = arith.addf %112, %157 : vector<8x32xf32>
    %159 = vector.broadcast %7 : vector<1x32xf32> to vector<8x32xf32>
    %160 = arith.addf %158, %159 : vector<8x32xf32>
    %c0_69 = arith.constant 0 : index
    %c0_70 = arith.constant 0 : index
    %c0_71 = arith.constant 0 : index
    %161 = vector.load %arg13[%c0_69, %c0_70, %c0_71] : memref<1x8x32xf32, #tpu.memory_space<vmem>>, vector<1x8x32xf32>
    %162 = vector.shape_cast %161 : vector<1x8x32xf32> to vector<8x32xf32>
    %163 = vector.shape_cast %160 : vector<8x32xf32> to vector<1x8x32xf32>
    tpu.vector_store %arg13[%c0_69, %c0_70, %c0_71], %163 {strides = array<i32>} : memref<1x8x32xf32, #tpu.memory_space<vmem>>, vector<1x8x32xf32>,
    return
  }
  func.func @transform_0(%arg0: i32) -> (i32, i32, i32) {
    %c0_i32 = arith.constant 0 : i32
    %c0_i32_0 = arith.constant 0 : i32
    %c0_i32_1 = arith.constant 0 : i32
    return %arg0, %c0_i32, %c0_i32_0 : i32, i32, i32
  }
  func.func @transform_1(%arg0: i32) -> (i32, i32) {
    %c0_i32 = arith.constant 0 : i32
    %c0_i32_0 = arith.constant 0 : i32
    %c0_i32_1 = arith.constant 0 : i32
    return %c0_i32, %c0_i32_0 : i32, i32
  }
  func.func @transform_2(%arg0: i32) -> (i32, i32) {
    %c0_i32 = arith.constant 0 : i32
    %c0_i32_0 = arith.constant 0 : i32
    %c0_i32_1 = arith.constant 0 : i32
    return %c0_i32, %c0_i32_0 : i32, i32
  }
  func.func @transform_3(%arg0: i32) -> (i32, i32) {
    %c0_i32 = arith.constant 0 : i32
    %c0_i32_0 = arith.constant 0 : i32
    %c0_i32_1 = arith.constant 0 : i32
    return %c0_i32, %c0_i32_0 : i32, i32
  }
  func.func @transform_4(%arg0: i32) -> (i32, i32, i32) {
    %c0_i32 = arith.constant 0 : i32
    %c0_i32_0 = arith.constant 0 : i32
    %c0_i32_1 = arith.constant 0 : i32
    %c0_i32_2 = arith.constant 0 : i32
    return %c0_i32, %c0_i32_0, %c0_i32_1 : i32, i32, i32
  }
  func.func @transform_5(%arg0: i32) -> (i32, i32, i32) {
    %c0_i32 = arith.constant 0 : i32
    %c0_i32_0 = arith.constant 0 : i32
    %c0_i32_1 = arith.constant 0 : i32
    %c0_i32_2 = arith.constant 0 : i32
    return %c0_i32, %c0_i32_0, %c0_i32_1 : i32, i32, i32
  }
  func.func @transform_6(%arg0: i32) -> (i32, i32, i32) {
    %c0_i32 = arith.constant 0 : i32
    %c0_i32_0 = arith.constant 0 : i32
    %c0_i32_1 = arith.constant 0 : i32
    %c0_i32_2 = arith.constant 0 : i32
    return %c0_i32, %c0_i32_0, %c0_i32_1 : i32, i32, i32
  }
  func.func @transform_7(%arg0: i32) -> (i32, i32) {
    %c0_i32 = arith.constant 0 : i32
    %c0_i32_0 = arith.constant 0 : i32
    %c0_i32_1 = arith.constant 0 : i32
    return %c0_i32, %c0_i32_0 : i32, i32
  }
  func.func @transform_8(%arg0: i32) -> (i32, i32) {
    %c0_i32 = arith.constant 0 : i32
    %c0_i32_0 = arith.constant 0 : i32
    %c0_i32_1 = arith.constant 0 : i32
    return %c0_i32, %c0_i32_0 : i32, i32
  }
  func.func @transform_9(%arg0: i32) -> (i32, i32) {
    %c0_i32 = arith.constant 0 : i32
    %c0_i32_0 = arith.constant 0 : i32
    %c0_i32_1 = arith.constant 0 : i32
    return %c0_i32, %c0_i32_0 : i32, i32
  }
  func.func @transform_10(%arg0: i32) -> (i32, i32) {
    %c0_i32 = arith.constant 0 : i32
    %c0_i32_0 = arith.constant 0 : i32
    %c0_i32_1 = arith.constant 0 : i32
    return %c0_i32, %c0_i32_0 : i32, i32
  }
  func.func @transform_11(%arg0: i32) -> (i32, i32) {
    %c0_i32 = arith.constant 0 : i32
    %c0_i32_0 = arith.constant 0 : i32
    %c0_i32_1 = arith.constant 0 : i32
    return %c0_i32, %c0_i32_0 : i32, i32
  }
  func.func @transform_12(%arg0: i32) -> (i32, i32, i32) {
    %c0_i32 = arith.constant 0 : i32
    %c0_i32_0 = arith.constant 0 : i32
    %c0_i32_1 = arith.constant 0 : i32
    return %arg0, %c0_i32, %c0_i32_0 : i32, i32, i32
  }
}

</mosaic_0001>

<llo_original>
// kernel: tpu_custom_call.1
$region0: #{tpu_custom_call.1}
  #allocation0 [shape = 'u32[]', space=smem, size = 0x4, offset = 0x4, fixed_abs, tag = 'smem constant byte address 0x4 - core index']
  #allocation1 [shape = 'u32[72,128]{1,0:T(1,128)}', space=vmem, size = 0x9000, scoped, tag = 'internal scratch']
  #allocation2 [shape = 'f32[1,8,32]{2,1,0:T(8,128)}', space=vmem, size = 0x1000, scoped, tag = 'scratch operand']
  #allocation3 [shape = 'f32[1,8,32]{2,1,0:T(8,128)}', space=vmem, size = 0x1000, scoped, tag = 'scratch operand']
  #allocation4 [shape = 'f32[8,32]{1,0:T(8,128)}', space=vmem, size = 0x1000, scoped, tag = 'scratch operand']
  %s0 = inlined_call_operand.vmem [shape: f32[2,8,32], index: 0, kind: input, shape index: {}]
  %s1 = inlined_call_operand.vmem [shape: f32[32,96], index: 1, kind: input, shape index: {}]
  %s2 = inlined_call_operand.vmem [shape: f32[32,32], index: 2, kind: input, shape index: {}]
  %s3 = inlined_call_operand.vmem [shape: f32[1,32], index: 3, kind: input, shape index: {}]
  %s4 = inlined_call_operand.vmem [shape: f32[1,32,128], index: 4, kind: input, shape index: {}]
  %s5 = inlined_call_operand.vmem [shape: f32[1,1,128], index: 5, kind: input, shape index: {}]
  %s6 = inlined_call_operand.vmem [shape: f32[1,128,32], index: 6, kind: input, shape index: {}]
  %s7 = inlined_call_operand.vmem [shape: f32[1,32], index: 7, kind: input, shape index: {}]
  %s8 = inlined_call_operand.vmem [shape: f32[1,32], index: 8, kind: input, shape index: {}]
  %s9 = inlined_call_operand.vmem [shape: f32[1,32], index: 9, kind: input, shape index: {}]
  %s10 = inlined_call_operand.vmem [shape: f32[1,32], index: 10, kind: input, shape index: {}]
  %s11 = inlined_call_operand.vmem [shape: f32[1,32], index: 11, kind: input, shape index: {}]
  %s12 = inlined_call_operand.hbm [shape: f32[2,8,32], index: 12, kind: output, shape index: {}]
  %s13 = sld [smem:[#allocation0]]
  $region81: #{tpu_custom_call.1} parent=0
    _
  %s15 = ssub.s32 1, %s13
  %s16 = scalar_select 0, %s15, %s13
  $region1: #{tpu_custom_call.1} parent=0
    #allocation5 [shape = 'u8[8192]{0}', space=vmem, size = 0x2000, scoped, tag = 'output window, operand 0']
    #allocation6 [shape = 's32[2]{0}', space=sflag, size = 0x8, scoped, tag = 'scoped memory for tpu_custom_call.1']
    %17 = vsyncpa [#allocation6], 0
    %s18 = scalar_lea.sflag [#allocation6], 1
    %19 = vsyncpa %s18, 0
    loop: start=0, step=1, limit=4
    $region2: #{tpu_custom_call.1} parent=1 // loop_pre_header
      _
    $region3: #{tpu_custom_call.1} parent=1 // loop_header
      %s21 = sphi 0, %s25
      %p22 = scmp.ge.s32.totalorder %s21, 4
      %s31 = sphi 0, %s33
      %s34 = sphi 0, %s31
      %s35 = sphi 0, %s34
      %s51 = sphi 0, %s35
      %s55 = sphi 0, %s55
      %s57 = sphi 0, %s55
      %s58 = sphi 0, %s57
      %s72 = sphi 0, %s58
      %s76 = sphi 0, %s76
      %s78 = sphi 0, %s76
      %s79 = sphi 0, %s78
      %s93 = sphi 0, %s79
      %s97 = sphi 0, %s97
      %s99 = sphi 0, %s97
      %s100 = sphi 0, %s99
      %s114 = sphi 0, %s100
      %s118 = sphi 0, %s118
      %s120 = sphi 0, %s118
      %s121 = sphi 0, %s120
      %s135 = sphi 0, %s121
      %s139 = sphi 0, %s139
      %s141 = sphi 0, %s139
      %s142 = sphi 0, %s141
      %s156 = sphi 0, %s142
      %s160 = sphi 0, %s160
      %s162 = sphi 0, %s160
      %s163 = sphi 0, %s162
      %s177 = sphi 0, %s163
      %s181 = sphi 0, %s181
      %s183 = sphi 0, %s181
      %s184 = sphi 0, %s183
      %s198 = sphi 0, %s184
      %s202 = sphi 0, %s202
      %s204 = sphi 0, %s202
      %s205 = sphi 0, %s204
      %s219 = sphi 0, %s205
      %s223 = sphi 0, %s223
      %s225 = sphi 0, %s223
      %s226 = sphi 0, %s225
      %s240 = sphi 0, %s226
      %s244 = sphi 0, %s244
      %s246 = sphi 0, %s244
      %s247 = sphi 0, %s246
      %s261 = sphi 0, %s247
      %s265 = sphi 0, %s265
      %s267 = sphi 0, %s265
      %s268 = sphi 0, %s267
      %s282 = sphi 0, %s268
      %s288 = sphi 0, %s290
      %s291 = sphi 0, %s288
      %s292 = sphi 0, %s291
      %s308 = sphi 0, %s292
    $region4: #{tpu_custom_call.1} parent=1 // loop_header_branch
      %24 = sbr.rel (%p22) target = $region8
    $region5: #{tpu_custom_call.1} parent=1 // loop_body
      %s26 = ssub.s32 %s21, 1
      %s27 = ssub.s32 %s21, 2
      %s28 = sadd.s32 %s21, 1
      %s29 = ssub.s32 %s21, %s28
      %p30 = scmp.eq.s32.totalorder %s29, 0
      %s32 = sadd.s32 %s31, 1
      %s33 = scalar_select %p30, %s31, %s32
      %p36 = pneg %p30
      %p37 = scmp.eq.s32.totalorder %s21, 1
      %p38 = por %p36, %p37
      %p39 = scmp.ne.s32.totalorder %s31, %s34
      %p40 = scmp.eq.s32.totalorder %s21, 0
      %p41 = por %p39, %p40
      %p42 = scmp.ne.s32.totalorder %s31, %s34
      %p43 = scmp.eq.s32.totalorder %s26, 1
      %p44 = por %p42, %p43
      %p45 = scmp.ne.s32.totalorder %s34, %s35
      %p46 = scmp.eq.s32.totalorder %s26, 0
      %p47 = por %p45, %p46
      %p48 = scmp.ne.s32.totalorder %s34, %s35
      %p49 = scmp.eq.s32.totalorder %s27, 1
      %p50 = por %p48, %p49
      %p52 = scmp.ne.s32.totalorder %s35, %s51
      %p53 = scmp.eq.s32.totalorder %s27, 0
      %p54 = por %p52, %p53
      %s56 = sadd.s32 %s55, 1
      %p59 = scmp.eq.s32.totalorder %s21, 1
      %p60 = scmp.ne.s32.totalorder %s55, %s57
      %p61 = scmp.eq.s32.totalorder %s21, 0
      %p62 = por %p60, %p61
      %p63 = scmp.ne.s32.totalorder %s55, %s57
      %p64 = scmp.eq.s32.totalorder %s26, 1
      %p65 = por %p63, %p64
      %p66 = scmp.ne.s32.totalorder %s57, %s58
      %p67 = scmp.eq.s32.totalorder %s26, 0
      %p68 = por %p66, %p67
      %p69 = scmp.ne.s32.totalorder %s57, %s58
      %p70 = scmp.eq.s32.totalorder %s27, 1
      %p71 = por %p69, %p70
      %p73 = scmp.ne.s32.totalorder %s58, %s72
      %p74 = scmp.eq.s32.totalorder %s27, 0
      %p75 = por %p73, %p74
      %s77 = sadd.s32 %s76, 1
      %p80 = scmp.eq.s32.totalorder %s21, 1
      %p81 = scmp.ne.s32.totalorder %s76, %s78
      %p82 = scmp.eq.s32.totalorder %s21, 0
      %p83 = por %p81, %p82
      %p84 = scmp.ne.s32.totalorder %s76, %s78
      %p85 = scmp.eq.s32.totalorder %s26, 1
      %p86 = por %p84, %p85
      %p87 = scmp.ne.s32.totalorder %s78, %s79
      %p88 = scmp.eq.s32.totalorder %s26, 0
      %p89 = por %p87, %p88
      %p90 = scmp.ne.s32.totalorder %s78, %s79
      %p91 = scmp.eq.s32.totalorder %s27, 1
      %p92 = por %p90, %p91
      %p94 = scmp.ne.s32.totalorder %s79, %s93
      %p95 = scmp.eq.s32.totalorder %s27, 0
      %p96 = por %p94, %p95
      %s98 = sadd.s32 %s97, 1
      %p101 = scmp.eq.s32.totalorder %s21, 1
      %p102 = scmp.ne.s32.totalorder %s97, %s99
      %p103 = scmp.eq.s32.totalorder %s21, 0
      %p104 = por %p102, %p103
      %p105 = scmp.ne.s32.totalorder %s97, %s99
      %p106 = scmp.eq.s32.totalorder %s26, 1
      %p107 = por %p105, %p106
      %p108 = scmp.ne.s32.totalorder %s99, %s100
      %p109 = scmp.eq.s32.totalorder %s26, 0
      %p110 = por %p108, %p109
      %p111 = scmp.ne.s32.totalorder %s99, %s100
      %p112 = scmp.eq.s32.totalorder %s27, 1
      %p113 = por %p111, %p112
      %p115 = scmp.ne.s32.totalorder %s100, %s114
      %p116 = scmp.eq.s32.totalorder %s27, 0
      %p117 = por %p115, %p116
      %s119 = sadd.s32 %s118, 1
      %p122 = scmp.eq.s32.totalorder %s21, 1
      %p123 = scmp.ne.s32.totalorder %s118, %s120
      %p124 = scmp.eq.s32.totalorder %s21, 0
      %p125 = por %p123, %p124
      %p126 = scmp.ne.s32.totalorder %s118, %s120
      %p127 = scmp.eq.s32.totalorder %s26, 1
      %p128 = por %p126, %p127
      %p129 = scmp.ne.s32.totalorder %s120, %s121
      %p130 = scmp.eq.s32.totalorder %s26, 0
      %p131 = por %p129, %p130
      %p132 = scmp.ne.s32.totalorder %s120, %s121
      %p133 = scmp.eq.s32.totalorder %s27, 1
      %p134 = por %p132, %p133
      %p136 = scmp.ne.s32.totalorder %s121, %s135
      %p137 = scmp.eq.s32.totalorder %s27, 0
      %p138 = por %p136, %p137
      %s140 = sadd.s32 %s139, 1
      %p143 = scmp.eq.s32.totalorder %s21, 1
      %p144 = scmp.ne.s32.totalorder %s139, %s141
      %p145 = scmp.eq.s32.totalorder %s21, 0
      %p146 = por %p144, %p145
      %p147 = scmp.ne.s32.totalorder %s139, %s141
      %p148 = scmp.eq.s32.totalorder %s26, 1
      %p149 = por %p147, %p148
      %p150 = scmp.ne.s32.totalorder %s141, %s142
      %p151 = scmp.eq.s32.totalorder %s26, 0
      %p152 = por %p150, %p151
      %p153 = scmp.ne.s32.totalorder %s141, %s142
      %p154 = scmp.eq.s32.totalorder %s27, 1
      %p155 = por %p153, %p154
      %p157 = scmp.ne.s32.totalorder %s142, %s156
      %p158 = scmp.eq.s32.totalorder %s27, 0
      %p159 = por %p157, %p158
      %s161 = sadd.s32 %s160, 1
      %p164 = scmp.eq.s32.totalorder %s21, 1
      %p165 = scmp.ne.s32.totalorder %s160, %s162
      %p166 = scmp.eq.s32.totalorder %s21, 0
      %p167 = por %p165, %p166
      %p168 = scmp.ne.s32.totalorder %s160, %s162
      %p169 = scmp.eq.s32.totalorder %s26, 1
      %p170 = por %p168, %p169
      %p171 = scmp.ne.s32.totalorder %s162, %s163
      %p172 = scmp.eq.s32.totalorder %s26, 0
      %p173 = por %p171, %p172
      %p174 = scmp.ne.s32.totalorder %s162, %s163
      %p175 = scmp.eq.s32.totalorder %s27, 1
      %p176 = por %p174, %p175
      %p178 = scmp.ne.s32.totalorder %s163, %s177
      %p179 = scmp.eq.s32.totalorder %s27, 0
      %p180 = por %p178, %p179
      %s182 = sadd.s32 %s181, 1
      %p185 = scmp.eq.s32.totalorder %s21, 1
      %p186 = scmp.ne.s32.totalorder %s181, %s183
      %p187 = scmp.eq.s32.totalorder %s21, 0
      %p188 = por %p186, %p187
      %p189 = scmp.ne.s32.totalorder %s181, %s183
      %p190 = scmp.eq.s32.totalorder %s26, 1
      %p191 = por %p189, %p190
      %p192 = scmp.ne.s32.totalorder %s183, %s184
      %p193 = scmp.eq.s32.totalorder %s26, 0
      %p194 = por %p192, %p193
      %p195 = scmp.ne.s32.totalorder %s183, %s184
      %p196 = scmp.eq.s32.totalorder %s27, 1
      %p197 = por %p195, %p196
      %p199 = scmp.ne.s32.totalorder %s184, %s198
      %p200 = scmp.eq.s32.totalorder %s27, 0
      %p201 = por %p199, %p200
      %s203 = sadd.s32 %s202, 1
      %p206 = scmp.eq.s32.totalorder %s21, 1
      %p207 = scmp.ne.s32.totalorder %s202, %s204
      %p208 = scmp.eq.s32.totalorder %s21, 0
      %p209 = por %p207, %p208
      %p210 = scmp.ne.s32.totalorder %s202, %s204
      %p211 = scmp.eq.s32.totalorder %s26, 1
      %p212 = por %p210, %p211
      %p213 = scmp.ne.s32.totalorder %s204, %s205
      %p214 = scmp.eq.s32.totalorder %s26, 0
      %p215 = por %p213, %p214
      %p216 = scmp.ne.s32.totalorder %s204, %s205
      %p217 = scmp.eq.s32.totalorder %s27, 1
      %p218 = por %p216, %p217
      %p220 = scmp.ne.s32.totalorder %s205, %s219
      %p221 = scmp.eq.s32.totalorder %s27, 0
      %p222 = por %p220, %p221
      %s224 = sadd.s32 %s223, 1
      %p227 = scmp.eq.s32.totalorder %s21, 1
      %p228 = scmp.ne.s32.totalorder %s223, %s225
      %p229 = scmp.eq.s32.totalorder %s21, 0
      %p230 = por %p228, %p229
      %p231 = scmp.ne.s32.totalorder %s223, %s225
      %p232 = scmp.eq.s32.totalorder %s26, 1
      %p233 = por %p231, %p232
      %p234 = scmp.ne.s32.totalorder %s225, %s226
      %p235 = scmp.eq.s32.totalorder %s26, 0
      %p236 = por %p234, %p235
      %p237 = scmp.ne.s32.totalorder %s225, %s226
      %p238 = scmp.eq.s32.totalorder %s27, 1
      %p239 = por %p237, %p238
      %p241 = scmp.ne.s32.totalorder %s226, %s240
      %p242 = scmp.eq.s32.totalorder %s27, 0
      %p243 = por %p241, %p242
      %s245 = sadd.s32 %s244, 1
      %p248 = scmp.eq.s32.totalorder %s21, 1
      %p249 = scmp.ne.s32.totalorder %s244, %s246
      %p250 = scmp.eq.s32.totalorder %s21, 0
      %p251 = por %p249, %p250
      %p252 = scmp.ne.s32.totalorder %s244, %s246
      %p253 = scmp.eq.s32.totalorder %s26, 1
      %p254 = por %p252, %p253
      %p255 = scmp.ne.s32.totalorder %s246, %s247
      %p256 = scmp.eq.s32.totalorder %s26, 0
      %p257 = por %p255, %p256
      %p258 = scmp.ne.s32.totalorder %s246, %s247
      %p259 = scmp.eq.s32.totalorder %s27, 1
      %p260 = por %p258, %p259
      %p262 = scmp.ne.s32.totalorder %s247, %s261
      %p263 = scmp.eq.s32.totalorder %s27, 0
      %p264 = por %p262, %p263
      %s266 = sadd.s32 %s265, 1
      %p269 = scmp.eq.s32.totalorder %s21, 1
      %p270 = scmp.ne.s32.totalorder %s265, %s267
      %p271 = scmp.eq.s32.totalorder %s21, 0
      %p272 = por %p270, %p271
      %p273 = scmp.ne.s32.totalorder %s265, %s267
      %p274 = scmp.eq.s32.totalorder %s26, 1
      %p275 = por %p273, %p274
      %p276 = scmp.ne.s32.totalorder %s267, %s268
      %p277 = scmp.eq.s32.totalorder %s26, 0
      %p278 = por %p276, %p277
      %p279 = scmp.ne.s32.totalorder %s267, %s268
      %p280 = scmp.eq.s32.totalorder %s27, 1
      %p281 = por %p279, %p280
      %p283 = scmp.ne.s32.totalorder %s268, %s282
      %p284 = scmp.eq.s32.totalorder %s27, 0
      %p285 = por %p283, %p284
      %s286 = ssub.s32 %s21, %s28
      %p287 = scmp.eq.s32.totalorder %s286, 0
      %s289 = sadd.s32 %s288, 1
      %s290 = scalar_select %p287, %s288, %s289
      %p293 = pneg %p287
      %p294 = scmp.eq.s32.totalorder %s21, 1
      %p295 = por %p293, %p294
      %p296 = scmp.ne.s32.totalorder %s288, %s291
      %p297 = scmp.eq.s32.totalorder %s21, 0
      %p298 = por %p296, %p297
      %p299 = scmp.ne.s32.totalorder %s288, %s291
      %p300 = scmp.eq.s32.totalorder %s26, 1
      %p301 = por %p299, %p300
      %p302 = scmp.ne.s32.totalorder %s291, %s292
      %p303 = scmp.eq.s32.totalorder %s26, 0
      %p304 = por %p302, %p303
      %p305 = scmp.ne.s32.totalorder %s291, %s292
      %p306 = scmp.eq.s32.totalorder %s27, 1
      %p307 = por %p305, %p306
      %p309 = scmp.ne.s32.totalorder %s292, %s308
      %p310 = scmp.eq.s32.totalorder %s27, 0
      %p311 = por %p309, %p310
      %p312 = scmp.le.s32.totalorder 1, %s21
      %p313 = scmp.lt.s32.totalorder %s21, 3
      %p314 = pnand %p312, %p313
      %p315 = pneg %p314
      // Predicated region
      $region9: #{tpu_custom_call.1} parent=5 // pred_check
        _
      $region10: #{tpu_custom_call.1} parent=5 // pred_check_branch
        %317 = sbr.rel (%p314) target = $region12
      $region11: #{tpu_custom_call.1} parent=5 // pred_region
        %s318 = ssub.s32 %s21, 1
        // Predicated region
        $region13: #{tpu_custom_call.1} parent=11 // pred_check
          %p319 = pneg %p68
        $region14: #{tpu_custom_call.1} parent=11 // pred_check_branch
          %321 = sbr.rel (%p319) target = $region16
        $region15: #{tpu_custom_call.1} parent=11 // pred_region
          _
        $region16: #{tpu_custom_call.1} parent=11 // pred_fallthru
          _
        // Predicated region
        $region17: #{tpu_custom_call.1} parent=11 // pred_check
          %p322 = pneg %p89
        $region18: #{tpu_custom_call.1} parent=11 // pred_check_branch
          %324 = sbr.rel (%p322) target = $region20
        $region19: #{tpu_custom_call.1} parent=11 // pred_region
          _
        $region20: #{tpu_custom_call.1} parent=11 // pred_fallthru
          _
        // Predicated region
        $region21: #{tpu_custom_call.1} parent=11 // pred_check
          %p325 = pneg %p110
        $region22: #{tpu_custom_call.1} parent=11 // pred_check_branch
          %327 = sbr.rel (%p325) target = $region24
        $region23: #{tpu_custom_call.1} parent=11 // pred_region
          _
        $region24: #{tpu_custom_call.1} parent=11 // pred_fallthru
          _
        // Predicated region
        $region25: #{tpu_custom_call.1} parent=11 // pred_check
          %p328 = pneg %p131
        $region26: #{tpu_custom_call.1} parent=11 // pred_check_branch
          %330 = sbr.rel (%p328) target = $region28
        $region27: #{tpu_custom_call.1} parent=11 // pred_region
          _
        $region28: #{tpu_custom_call.1} parent=11 // pred_fallthru
          _
        // Predicated region
        $region29: #{tpu_custom_call.1} parent=11 // pred_check
          %p331 = pneg %p152
        $region30: #{tpu_custom_call.1} parent=11 // pred_check_branch
          %333 = sbr.rel (%p331) target = $region32
        $region31: #{tpu_custom_call.1} parent=11 // pred_region
          _
        $region32: #{tpu_custom_call.1} parent=11 // pred_fallthru
          _
        // Predicated region
        $region33: #{tpu_custom_call.1} parent=11 // pred_check
          %p334 = pneg %p173
        $region34: #{tpu_custom_call.1} parent=11 // pred_check_branch
          %336 = sbr.rel (%p334) target = $region36
        $region35: #{tpu_custom_call.1} parent=11 // pred_region
          _
        $region36: #{tpu_custom_call.1} parent=11 // pred_fallthru
          _
        // Predicated region
        $region37: #{tpu_custom_call.1} parent=11 // pred_check
          %p337 = pneg %p194
        $region38: #{tpu_custom_call.1} parent=11 // pred_check_branch
          %339 = sbr.rel (%p337) target = $region40
        $region39: #{tpu_custom_call.1} parent=11 // pred_region
          _
        $region40: #{tpu_custom_call.1} parent=11 // pred_fallthru
          _
        // Predicated region
        $region41: #{tpu_custom_call.1} parent=11 // pred_check
          %p340 = pneg %p215
        $region42: #{tpu_custom_call.1} parent=11 // pred_check_branch
          %342 = sbr.rel (%p340) target = $region44
        $region43: #{tpu_custom_call.1} parent=11 // pred_region
          _
        $region44: #{tpu_custom_call.1} parent=11 // pred_fallthru
          _
        // Predicated region
        $region45: #{tpu_custom_call.1} parent=11 // pred_check
          %p343 = pneg %p236
        $region46: #{tpu_custom_call.1} parent=11 // pred_check_branch
          %345 = sbr.rel (%p343) target = $region48
        $region47: #{tpu_custom_call.1} parent=11 // pred_region
          _
        $region48: #{tpu_custom_call.1} parent=11 // pred_fallthru
          _
        // Predicated region
        $region49: #{tpu_custom_call.1} parent=11 // pred_check
          %p346 = pneg %p257
        $region50: #{tpu_custom_call.1} parent=11 // pred_check_branch
          %348 = sbr.rel (%p346) target = $region52
        $region51: #{tpu_custom_call.1} parent=11 // pred_region
          _
        $region52: #{tpu_custom_call.1} parent=11 // pred_fallthru
          _
        // Predicated region
        $region53: #{tpu_custom_call.1} parent=11 // pred_check
          %p349 = pneg %p278
        $region54: #{tpu_custom_call.1} parent=11 // pred_check_branch
          %351 = sbr.rel (%p349) target = $region56
        $region55: #{tpu_custom_call.1} parent=11 // pred_region
          _
        $region56: #{tpu_custom_call.1} parent=11 // pred_fallthru
          _
      $region12: #{tpu_custom_call.1} parent=5 // pred_fallthru
        _
      %p352 = scmp.lt.s32.totalorder %s21, 2
      // Predicated region
      $region57: #{tpu_custom_call.1} parent=5 // pred_check
        %p353 = pneg %p352
      $region58: #{tpu_custom_call.1} parent=5 // pred_check_branch
        %355 = sbr.rel (%p353) target = $region60
      $region59: #{tpu_custom_call.1} parent=5 // pred_region
        // Predicated region
        $region61: #{tpu_custom_call.1} parent=59 // pred_check
          %p356 = pneg %p41
        $region62: #{tpu_custom_call.1} parent=59 // pred_check_branch
          %358 = sbr.rel (%p356) target = $region64
        $region63: #{tpu_custom_call.1} parent=59 // pred_region
          %p359 = scmp.lt.s32.totalorder %s21, 1
          %s360 = scalar_select %p359, %s21, 1
          %s361 = smul.addr %s360, 8
          %s362 = scalar_lea.vmem %s0, %s361
        $region64: #{tpu_custom_call.1} parent=59 // pred_fallthru
          _
      $region60: #{tpu_custom_call.1} parent=5 // pred_fallthru
        _
      %p363 = scmp.le.s32.totalorder 1, %s21
      %p364 = scmp.lt.s32.totalorder %s21, 3
      %p365 = pnand %p363, %p364
      %p366 = pneg %p365
      // Predicated region
      $region65: #{tpu_custom_call.1} parent=5 // pred_check
        _
      $region66: #{tpu_custom_call.1} parent=5 // pred_check_branch
        %368 = sbr.rel (%p365) target = $region68
      $region67: #{tpu_custom_call.1} parent=5 // pred_region
        %s369 = ssub.s32 %s21, 1
        %p370 = scmp.lt.s32.totalorder %s26, 1
        %s371 = scalar_select %p370, %s26, 1
        %s372 = smul.addr %s371, 8
        %s373 = scalar_lea.vmem %s0, %s372
        %p374 = pneg %p47
        %p375 = pneg %p44
        %p376 = pneg %p68
        %p377 = pneg %p65
        %p378 = pneg %p89
        %p379 = pneg %p86
        %p380 = pneg %p110
        %p381 = pneg %p107
        %p382 = pneg %p131
        %p383 = pneg %p128
        %p384 = pneg %p152
        %p385 = pneg %p149
        %p386 = pneg %p173
        %p387 = pneg %p170
        %p388 = pneg %p194
        %p389 = pneg %p191
        %p390 = pneg %p215
        %p391 = pneg %p212
        %p392 = pneg %p236
        %p393 = pneg %p233
        %p394 = pneg %p257
        %p395 = pneg %p254
        %p396 = pneg %p278
        %p397 = pneg %p275
        %p398 = pneg %p304
        %p399 = pneg %p301
        %s400 = sand.u32 %s291, 1
        %s401 = scalar_lea.sflag [#allocation6], %s400
        %s402 = sand.u32 %s291, 1
        %s403 = smul.addr %s402, 8
        %s404 = scalar_lea.vmem [#allocation5], %s403
        %p405 = scmp.lt.s32.totalorder %s26, 1
        %s406 = scalar_select %p405, %s26, 1
        %s407 = smul.addr %s406, 8
        %s408 = scalar_lea.vmem %s0, %s407
        %v409 = vld [vmem:[%s408] sm:$0xff]
        %v410 = vld [vmem:[%s8] sm:$0x1]
        %v411 = vld [vmem:[%s9] sm:$0x1]
        %v412 = vld [vmem:[%s10] sm:$0x1]
        %v413 = vld [vmem:[%s11] sm:$0x1]
        %v414 = vld [vmem:[%s3] sm:$0x1]
        %v415 = vld [vmem:[%s7] sm:$0x1]
        %vm416 = vcmask 261120
        %v417 = vsel %vm416, %v409, 0.0
        %418 = vadd.xlane.f32.xlu0 %v417
        %v419 = vpop.xlane.xlu0 %418
        %v420 = vrcp.pop 32.0
        %v421 = vmul.f32 32.0, %v420
        %v422 = vsub.f32 1.0, %v421
        %v423 = vmul.f32 %v420, %v422
        %v424 = vadd.f32 %v420, %v423
        %vm425 = vweird.f32 %v420
        %v426 = vsel %vm425, %v420, %v424
        %v427 = vmul.f32 %v419, %v426
        %v428 = vsub.f32 %v409, %v427
        %v429 = vmul.f32 %v428, %v428
        %v430 = vsel %vm416, %v429, 0.0
        %431 = vadd.xlane.f32.xlu0 %v430
        %v432 = vpop.xlane.xlu0 %431
        %v433 = vmul.f32 %v432, %v426
        %v434 = vadd.f32 %v433, 1e-05
        %v435 = vrsqrt.pop %v434
        %v436 = vmul.f32 %v435, %v434
        %v437 = vmul.f32 %v436, %v435
        %v438 = vmul.f32 0.5, %v437
        %v439 = vsub.f32 1.5, %v438
        %v440 = vmul.f32 %v435, %v439
        %vm441 = vweird.f32 %v434
        %vm442 = vweird.f32 %v435
        %vm443 = vmor %vm441, %vm442
        %v444 = vsel %vm443, %v435, %v440
        %v445 = vmul.f32 %v428, %v444
        %v447 = vperm.slane %v410, 0
        %v449 = vmul.f32 %v445, %v447
        %v451 = vperm.slane %v411, 0
        %v453 = vadd.f32 %v449, %v451
        %v454 = vld [vmem:[%s1] sm:$0xff]
        %v455 = vld [vmem:[%s1 + $0x8] sm:$0xff]
        %v456 = vld [vmem:[%s1 + $0x10] sm:$0xff]
        %v457 = vld [vmem:[%s1 + $0x18] sm:$0xff]
        %v459 = vsel %vm416, %v453, 0
        %461 = vmatpush.msra.mxu0 0.0
        %462 = vmatpush.msra.mxu0 0.0
        %463 = vmatpush.msra.mxu0 0.0
        %464 = vmatpush.msra.mxu0 0.0
        %465 = vmatpush.msra.mxu0 0.0
        %466 = vmatpush.msra.mxu0 0.0
        %467 = vmatpush.msra.mxu0 0.0
        %468 = vmatpush.msra.mxu0 0.0
        %469 = vmatpush.msra.mxu0 0.0
        %470 = vmatpush.msra.mxu0 0.0
        %471 = vmatpush.msra.mxu0 0.0
        %472 = vmatpush.msra.mxu0 0.0
        %473 = vmatpush.msra.mxu0 %v457
        %474 = vmatpush.msra.mxu0 %v456
        %475 = vmatpush.msra.mxu0 %v455
        %476 = vmatpush.msra.mxu0 %v454
        %477 = vmatmul.f32.gmra.mxu0 %v459
        %v478 = vpop.f32.mrf.mxu0
        %v479 = vadd.f32 0.0, %v478
        %480 = vdwg.mxu0
        %482 = vrot.lane.b32.xlu0 %v479, 120
        %v483 = vpop.permute.xlu0 %482
        %484 = vrot.lane.b32.xlu0 %v479, 112
        %v485 = vpop.permute.xlu0 %484
        %486 = vrot.lane.b32.xlu0 %v479, 104
        %v487 = vpop.permute.xlu0 %486
        %488 = vst.msk [vmem:[#allocation2] sm:$0xff] %vm416, %v479
        %v489 = vlaneseq
        %v490 = vshrl.u32 %v489, 7
        %v491 = vlaneseq
        %v492 = vand.u32 %v491, 127
        %v493 = vld [vmem:[#allocation2] sm:$0xff]
        %495 = vrot.lane.b32.xlu0 %v493, 120
        %v496 = vpop.permute.xlu0 %495
        %497 = vrot.lane.b32.xlu0 %v493, 112
        %v498 = vpop.permute.xlu0 %497
        %499 = vrot.lane.b32.xlu0 %v493, 104
        %v500 = vpop.permute.xlu0 %499
        %vm501 = vcmp.ge.s32.totalorder %v490, %v492
        %v502 = vsel %vm501, 0.0, -1e+30
        %503 = vrot.lane.b32.xlu0 %v479, 96
        %v504 = vpop.permute.xlu0 %503
        %vm505 = vcmask 64512
        %v506 = vsel %vm505, %v493, 0
        %v508 = vsel %vm505, %v504, 0
        %510 = vmatpush.xpose.msra.mxu0 0.0
        %511 = vmatpush.xpose.msra.mxu0 0.0
        %512 = vmatpush.xpose.msra.mxu0 0.0
        %513 = vmatpush.xpose.msra.mxu0 0.0
        %514 = vmatpush.xpose.msra.mxu0 0.0
        %515 = vmatpush.xpose.msra.mxu0 0.0
        %516 = vmatpush.xpose.msra.mxu0 0.0
        %517 = vmatpush.xpose.msra.mxu0 0.0
        %518 = vmatpush.xpose.msra.mxu0 0.0
        %519 = vmatpush.xpose.msra.mxu0 0.0
        %520 = vmatpush.xpose.msra.mxu0 0.0
        %521 = vmatpush.xpose.msra.mxu0 0.0
        %522 = vmatpush.xpose.msra.mxu0 0.0
        %523 = vmatpush.xpose.msra.mxu0 0.0
        %524 = vmatpush.xpose.msra.mxu0 0.0
        %525 = vmatpush.xpose.msra.mxu0 %v508
        %526 = vmatmul.f32.gmra.mxu0 %v506
        %v527 = vpop.f32.mrf.mxu0
        %v528 = vadd.f32 %v502, %v527
        %529 = vdwg.mxu0
        %530 = vrot.lane.b32.xlu0 %v483, 96
        %v531 = vpop.permute.xlu0 %530
        %v532 = vsel %vm505, %v496, 0
        %v534 = vsel %vm505, %v531, 0
        %536 = vmatpush.xpose.msra.mxu0 0.0
        %537 = vmatpush.xpose.msra.mxu0 0.0
        %538 = vmatpush.xpose.msra.mxu0 0.0
        %539 = vmatpush.xpose.msra.mxu0 0.0
        %540 = vmatpush.xpose.msra.mxu0 0.0
        %541 = vmatpush.xpose.msra.mxu0 0.0
        %542 = vmatpush.xpose.msra.mxu0 0.0
        %543 = vmatpush.xpose.msra.mxu0 0.0
        %544 = vmatpush.xpose.msra.mxu0 0.0
        %545 = vmatpush.xpose.msra.mxu0 0.0
        %546 = vmatpush.xpose.msra.mxu0 0.0
        %547 = vmatpush.xpose.msra.mxu0 0.0
        %548 = vmatpush.xpose.msra.mxu0 0.0
        %549 = vmatpush.xpose.msra.mxu0 0.0
        %550 = vmatpush.xpose.msra.mxu0 0.0
        %551 = vmatpush.xpose.msra.mxu0 %v534
        %552 = vmatmul.f32.gmra.mxu0 %v532
        %v553 = vpop.f32.mrf.mxu0
        %v554 = vadd.f32 %v502, %v553
        %555 = vdwg.mxu0
        %556 = vrot.lane.b32.xlu0 %v485, 96
        %v557 = vpop.permute.xlu0 %556
        %v558 = vsel %vm505, %v498, 0
        %v560 = vsel %vm505, %v557, 0
        %562 = vmatpush.xpose.msra.mxu0 0.0
        %563 = vmatpush.xpose.msra.mxu0 0.0
        %564 = vmatpush.xpose.msra.mxu0 0.0
        %565 = vmatpush.xpose.msra.mxu0 0.0
        %566 = vmatpush.xpose.msra.mxu0 0.0
        %567 = vmatpush.xpose.msra.mxu0 0.0
        %568 = vmatpush.xpose.msra.mxu0 0.0
        %569 = vmatpush.xpose.msra.mxu0 0.0
        %570 = vmatpush.xpose.msra.mxu0 0.0
        %571 = vmatpush.xpose.msra.mxu0 0.0
        %572 = vmatpush.xpose.msra.mxu0 0.0
        %573 = vmatpush.xpose.msra.mxu0 0.0
        %574 = vmatpush.xpose.msra.mxu0 0.0
        %575 = vmatpush.xpose.msra.mxu0 0.0
        %576 = vmatpush.xpose.msra.mxu0 0.0
        %577 = vmatpush.xpose.msra.mxu0 %v560
        %578 = vmatmul.f32.gmra.mxu0 %v558
        %v579 = vpop.f32.mrf.mxu0
        %v580 = vadd.f32 %v502, %v579
        %581 = vdwg.mxu0
        %582 = vrot.lane.b32.xlu0 %v487, 96
        %v583 = vpop.permute.xlu0 %582
        %v584 = vsel %vm505, %v500, 0
        %v586 = vsel %vm505, %v583, 0
        %588 = vmatpush.xpose.msra.mxu0 0.0
        %589 = vmatpush.xpose.msra.mxu0 0.0
        %590 = vmatpush.xpose.msra.mxu0 0.0
        %591 = vmatpush.xpose.msra.mxu0 0.0
        %592 = vmatpush.xpose.msra.mxu0 0.0
        %593 = vmatpush.xpose.msra.mxu0 0.0
        %594 = vmatpush.xpose.msra.mxu0 0.0
        %595 = vmatpush.xpose.msra.mxu0 0.0
        %596 = vmatpush.xpose.msra.mxu0 0.0
        %597 = vmatpush.xpose.msra.mxu0 0.0
        %598 = vmatpush.xpose.msra.mxu0 0.0
        %599 = vmatpush.xpose.msra.mxu0 0.0
        %600 = vmatpush.xpose.msra.mxu0 0.0
        %601 = vmatpush.xpose.msra.mxu0 0.0
        %602 = vmatpush.xpose.msra.mxu0 0.0
        %603 = vmatpush.xpose.msra.mxu0 %v586
        %604 = vmatmul.f32.gmra.mxu0 %v584
        %v605 = vpop.f32.mrf.mxu0
        %v606 = vadd.f32 %v502, %v605
        %607 = vdwg.mxu0
        %v608 = vsel %vm505, %v528, -inf
        %609 = vmax.xlane.f32.xlu0 %v608
        %v610 = vpop.xlane.xlu0 %609
        %v611 = vsel %vm505, %v554, -inf
        %612 = vmax.xlane.f32.xlu0 %v611
        %v613 = vpop.xlane.xlu0 %612
        %v614 = vsel %vm505, %v580, -inf
        %615 = vmax.xlane.f32.xlu0 %v614
        %v616 = vpop.xlane.xlu0 %615
        %v617 = vsel %vm505, %v606, -inf
        %618 = vmax.xlane.f32.xlu0 %v617
        %v619 = vpop.xlane.xlu0 %618
        %v620 = vsub.f32 %v528, %v610
        %v621 = vsub.f32 %v554, %v613
        %v622 = vsub.f32 %v580, %v616
        %v623 = vsub.f32 %v606, %v619
        %v624 = vmul.f32 %v620, 1.442695
        %v625 = vpow.pop %v624
        %v626 = vmul.f32 %v621, 1.442695
        %v627 = vpow.pop %v626
        %v628 = vmul.f32 %v622, 1.442695
        %v629 = vpow.pop %v628
        %v630 = vmul.f32 %v623, 1.442695
        %v631 = vpow.pop %v630
        %v632 = vsel %vm505, %v625, 0.0
        %633 = vadd.xlane.f32.xlu0 %v632
        %v634 = vpop.xlane.xlu0 %633
        %v635 = vsel %vm505, %v627, 0.0
        %636 = vadd.xlane.f32.xlu0 %v635
        %v637 = vpop.xlane.xlu0 %636
        %v638 = vsel %vm505, %v629, 0.0
        %639 = vadd.xlane.f32.xlu0 %v638
        %v640 = vpop.xlane.xlu0 %639
        %v641 = vsel %vm505, %v631, 0.0
        %642 = vadd.xlane.f32.xlu0 %v641
        %v643 = vpop.xlane.xlu0 %642
        %644 = vrot.lane.b32.xlu0 %v479, 64
        %v645 = vpop.permute.xlu0 %644
        %v648 = vsel %vm505, %v625, 0
        %650 = vmatpush.msra.mxu0 0.0
        %651 = vmatpush.msra.mxu0 0.0
        %652 = vmatpush.msra.mxu0 0.0
        %653 = vmatpush.msra.mxu0 0.0
        %654 = vmatpush.msra.mxu0 0.0
        %655 = vmatpush.msra.mxu0 0.0
        %656 = vmatpush.msra.mxu0 0.0
        %657 = vmatpush.msra.mxu0 0.0
        %658 = vmatpush.msra.mxu0 0.0
        %659 = vmatpush.msra.mxu0 0.0
        %660 = vmatpush.msra.mxu0 0.0
        %661 = vmatpush.msra.mxu0 0.0
        %662 = vmatpush.msra.mxu0 0.0
        %663 = vmatpush.msra.mxu0 0.0
        %664 = vmatpush.msra.mxu0 0.0
        %665 = vmatpush.msra.mxu0 %v645
        %666 = vmatmul.f32.gmra.mxu0 %v648
        %v667 = vpop.f32.mrf.mxu0
        %v668 = vadd.f32 0.0, %v667
        %669 = vdwg.mxu0
        %670 = vrot.lane.b32.xlu0 %v483, 64
        %v671 = vpop.permute.xlu0 %670
        %v674 = vsel %vm505, %v627, 0
        %676 = vmatpush.msra.mxu0 0.0
        %677 = vmatpush.msra.mxu0 0.0
        %678 = vmatpush.msra.mxu0 0.0
        %679 = vmatpush.msra.mxu0 0.0
        %680 = vmatpush.msra.mxu0 0.0
        %681 = vmatpush.msra.mxu0 0.0
        %682 = vmatpush.msra.mxu0 0.0
        %683 = vmatpush.msra.mxu0 0.0
        %684 = vmatpush.msra.mxu0 0.0
        %685 = vmatpush.msra.mxu0 0.0
        %686 = vmatpush.msra.mxu0 0.0
        %687 = vmatpush.msra.mxu0 0.0
        %688 = vmatpush.msra.mxu0 0.0
        %689 = vmatpush.msra.mxu0 0.0
        %690 = vmatpush.msra.mxu0 0.0
        %691 = vmatpush.msra.mxu0 %v671
        %692 = vmatmul.f32.gmra.mxu0 %v674
        %v693 = vpop.f32.mrf.mxu0
        %v694 = vadd.f32 0.0, %v693
        %695 = vdwg.mxu0
        %696 = vrot.lane.b32.xlu0 %v485, 64
        %v697 = vpop.permute.xlu0 %696
        %v700 = vsel %vm505, %v629, 0
        %702 = vmatpush.msra.mxu0 0.0
        %703 = vmatpush.msra.mxu0 0.0
        %704 = vmatpush.msra.mxu0 0.0
        %705 = vmatpush.msra.mxu0 0.0
        %706 = vmatpush.msra.mxu0 0.0
        %707 = vmatpush.msra.mxu0 0.0
        %708 = vmatpush.msra.mxu0 0.0
        %709 = vmatpush.msra.mxu0 0.0
        %710 = vmatpush.msra.mxu0 0.0
        %711 = vmatpush.msra.mxu0 0.0
        %712 = vmatpush.msra.mxu0 0.0
        %713 = vmatpush.msra.mxu0 0.0
        %714 = vmatpush.msra.mxu0 0.0
        %715 = vmatpush.msra.mxu0 0.0
        %716 = vmatpush.msra.mxu0 0.0
        %717 = vmatpush.msra.mxu0 %v697
        %718 = vmatmul.f32.gmra.mxu0 %v700
        %v719 = vpop.f32.mrf.mxu0
        %v720 = vadd.f32 0.0, %v719
        %721 = vdwg.mxu0
        %722 = vrot.lane.b32.xlu0 %v487, 64
        %v723 = vpop.permute.xlu0 %722
        %v726 = vsel %vm505, %v631, 0
        %728 = vmatpush.msra.mxu0 0.0
        %729 = vmatpush.msra.mxu0 0.0
        %730 = vmatpush.msra.mxu0 0.0
        %731 = vmatpush.msra.mxu0 0.0
        %732 = vmatpush.msra.mxu0 0.0
        %733 = vmatpush.msra.mxu0 0.0
        %734 = vmatpush.msra.mxu0 0.0
        %735 = vmatpush.msra.mxu0 0.0
        %736 = vmatpush.msra.mxu0 0.0
        %737 = vmatpush.msra.mxu0 0.0
        %738 = vmatpush.msra.mxu0 0.0
        %739 = vmatpush.msra.mxu0 0.0
        %740 = vmatpush.msra.mxu0 0.0
        %741 = vmatpush.msra.mxu0 0.0
        %742 = vmatpush.msra.mxu0 0.0
        %743 = vmatpush.msra.mxu0 %v723
        %744 = vmatmul.f32.gmra.mxu0 %v726
        %v745 = vpop.f32.mrf.mxu0
        %v746 = vadd.f32 0.0, %v745
        %747 = vdwg.mxu0
        %v748 = vrcp.pop %v634
        %v749 = vmul.f32 %v634, %v748
        %v750 = vsub.f32 1.0, %v749
        %v751 = vmul.f32 %v748, %v750
        %v752 = vadd.f32 %v748, %v751
        %vm753 = vweird.f32 %v634
        %vm754 = vweird.f32 %v748
        %vm755 = vmor %vm753, %vm754
        %v756 = vsel %vm755, %v748, %v752
        %v757 = vand.u32 2147483647, %v634
        %vm758 = vcmp.eq.f32.partialorder %v757, 8.507059e+37
        %v759 = vand.u32 %v634, 2147483648
        %v760 = vor.u32 1.1754944e-38, %v759
        %v761 = vsel %vm758, %v760, %v756
        %v762 = vrcp.pop %v637
        %v763 = vmul.f32 %v637, %v762
        %v764 = vsub.f32 1.0, %v763
        %v765 = vmul.f32 %v762, %v764
        %v766 = vadd.f32 %v762, %v765
        %vm767 = vweird.f32 %v637
        %vm768 = vweird.f32 %v762
        %vm769 = vmor %vm767, %vm768
        %v770 = vsel %vm769, %v762, %v766
        %v771 = vand.u32 2147483647, %v637
        %vm772 = vcmp.eq.f32.partialorder %v771, 8.507059e+37
        %v773 = vand.u32 %v637, 2147483648
        %v774 = vor.u32 1.1754944e-38, %v773
        %v775 = vsel %vm772, %v774, %v770
        %v776 = vrcp.pop %v640
        %v777 = vmul.f32 %v640, %v776
        %v778 = vsub.f32 1.0, %v777
        %v779 = vmul.f32 %v776, %v778
        %v780 = vadd.f32 %v776, %v779
        %vm781 = vweird.f32 %v640
        %vm782 = vweird.f32 %v776
        %vm783 = vmor %vm781, %vm782
        %v784 = vsel %vm783, %v776, %v780
        %v785 = vand.u32 2147483647, %v640
        %vm786 = vcmp.eq.f32.partialorder %v785, 8.507059e+37
        %v787 = vand.u32 %v640, 2147483648
        %v788 = vor.u32 1.1754944e-38, %v787
        %v789 = vsel %vm786, %v788, %v784
        %v790 = vrcp.pop %v643
        %v791 = vmul.f32 %v643, %v790
        %v792 = vsub.f32 1.0, %v791
        %v793 = vmul.f32 %v790, %v792
        %v794 = vadd.f32 %v790, %v793
        %vm795 = vweird.f32 %v643
        %vm796 = vweird.f32 %v790
        %vm797 = vmor %vm795, %vm796
        %v798 = vsel %vm797, %v790, %v794
        %v799 = vand.u32 2147483647, %v643
        %vm800 = vcmp.eq.f32.partialorder %v799, 8.507059e+37
        %v801 = vand.u32 %v643, 2147483648
        %v802 = vor.u32 1.1754944e-38, %v801
        %v803 = vsel %vm800, %v802, %v798
        %v804 = vmul.f32 %v668, %v761
        %v805 = vmul.f32 %v694, %v775
        %v806 = vmul.f32 %v720, %v789
        %v807 = vmul.f32 %v746, %v803
        %809 = vrot.lane.b32.xlu0 %v805, 8
        %v810 = vpop.permute.xlu0 %809
        %813 = vrot.lane.b32.xlu0 %v806, 16
        %v814 = vpop.permute.xlu0 %813
        %817 = vrot.lane.b32.xlu0 %v807, 24
        %v818 = vpop.permute.xlu0 %817
        %v820 = vsel %vm505, %v804, %v810
        %vm821 = vcmask 130048
        %v822 = vsel %vm821, %v820, %v814
        %vm823 = vcmask 195584
        %v824 = vsel %vm823, %v822, %v818
        %825 = vst.msk [vmem:[#allocation3] sm:$0xff] %vm416, %v824
        %v826 = vld [vmem:[#allocation3] sm:$0xff]
        %v827 = vld [vmem:[%s2] sm:$0xff]
        %v828 = vld [vmem:[%s2 + $0x8] sm:$0xff]
        %v829 = vld [vmem:[%s2 + $0x10] sm:$0xff]
        %v830 = vld [vmem:[%s2 + $0x18] sm:$0xff]
        %v832 = vperm.slane %v414, 0
        %v835 = vsel %vm416, %v826, 0
        %837 = vmatpush.msra.mxu0 0.0
        %838 = vmatpush.msra.mxu0 0.0
        %839 = vmatpush.msra.mxu0 0.0
        %840 = vmatpush.msra.mxu0 0.0
        %841 = vmatpush.msra.mxu0 0.0
        %842 = vmatpush.msra.mxu0 0.0
        %843 = vmatpush.msra.mxu0 0.0
        %844 = vmatpush.msra.mxu0 0.0
        %845 = vmatpush.msra.mxu0 0.0
        %846 = vmatpush.msra.mxu0 0.0
        %847 = vmatpush.msra.mxu0 0.0
        %848 = vmatpush.msra.mxu0 0.0
        %849 = vmatpush.msra.mxu0 %v830
        %850 = vmatpush.msra.mxu0 %v829
        %851 = vmatpush.msra.mxu0 %v828
        %852 = vmatpush.msra.mxu0 %v827
        %853 = vmatmul.f32.gmra.mxu0 %v835
        %v854 = vpop.f32.mrf.mxu0
        %v855 = vadd.f32 %v832, %v854
        %856 = vdwg.mxu0
        %v857 = vadd.f32 %v409, %v855
        %v858 = vsel %vm416, %v857, 0.0
        %859 = vadd.xlane.f32.xlu0 %v858
        %v860 = vpop.xlane.xlu0 %859
        %v861 = vmul.f32 %v860, %v426
        %v862 = vsub.f32 %v857, %v861
        %v863 = vmul.f32 %v862, %v862
        %v864 = vsel %vm416, %v863, 0.0
        %865 = vadd.xlane.f32.xlu0 %v864
        %v866 = vpop.xlane.xlu0 %865
        %v867 = vmul.f32 %v866, %v426
        %v868 = vadd.f32 %v867, 1e-05
        %v869 = vrsqrt.pop %v868
        %v870 = vmul.f32 %v869, %v868
        %v871 = vmul.f32 %v870, %v869
        %v872 = vmul.f32 0.5, %v871
        %v873 = vsub.f32 1.5, %v872
        %v874 = vmul.f32 %v869, %v873
        %vm875 = vweird.f32 %v868
        %vm876 = vweird.f32 %v869
        %vm877 = vmor %vm875, %vm876
        %v878 = vsel %vm877, %v869, %v874
        %v879 = vmul.f32 %v862, %v878
        %v881 = vperm.slane %v412, 0
        %v883 = vmul.f32 %v879, %v881
        %v885 = vperm.slane %v413, 0
        %v887 = vadd.f32 %v883, %v885
        %888 = vst.msk [vmem:[#allocation4] sm:$0xff] %vm416, 0.0
        %v889 = vld [vmem:[%s4] sm:$0xff]
        %v890 = vld [vmem:[%s4 + $0x8] sm:$0xff]
        %v891 = vld [vmem:[%s4 + $0x10] sm:$0xff]
        %v892 = vld [vmem:[%s4 + $0x18] sm:$0xff]
        %v893 = vld [vmem:[%s5] sm:$0x1]
        %v895 = vperm.slane %v893, 0
        %v898 = vsel %vm416, %v887, 0
        %900 = vmatpush.msra.mxu0 0.0
        %901 = vmatpush.msra.mxu0 0.0
        %902 = vmatpush.msra.mxu0 0.0
        %903 = vmatpush.msra.mxu0 0.0
        %904 = vmatpush.msra.mxu0 0.0
        %905 = vmatpush.msra.mxu0 0.0
        %906 = vmatpush.msra.mxu0 0.0
        %907 = vmatpush.msra.mxu0 0.0
        %908 = vmatpush.msra.mxu0 0.0
        %909 = vmatpush.msra.mxu0 0.0
        %910 = vmatpush.msra.mxu0 0.0
        %911 = vmatpush.msra.mxu0 0.0
        %912 = vmatpush.msra.mxu0 %v892
        %913 = vmatpush.msra.mxu0 %v891
        %914 = vmatpush.msra.mxu0 %v890
        %915 = vmatpush.msra.mxu0 %v889
        %916 = vmatmul.f32.gmra.mxu0 %v898
        %v917 = vpop.f32.mrf.mxu0
        %v918 = vadd.f32 %v895, %v917
        %919 = vdwg.mxu0
        %v920 = vmax.f32 %v918, 0.0
        %v921 = vld [vmem:[#allocation4] sm:$0xff]
        %v922 = vld [vmem:[%s6] sm:$0xff]
        %v923 = vld [vmem:[%s6 + $0x8] sm:$0xff]
        %v924 = vld [vmem:[%s6 + $0x10] sm:$0xff]
        %v925 = vld [vmem:[%s6 + $0x18] sm:$0xff]
        %v926 = vld [vmem:[%s6 + $0x20] sm:$0xff]
        %v927 = vld [vmem:[%s6 + $0x28] sm:$0xff]
        %v928 = vld [vmem:[%s6 + $0x30] sm:$0xff]
        %v929 = vld [vmem:[%s6 + $0x38] sm:$0xff]
        %v930 = vld [vmem:[%s6 + $0x40] sm:$0xff]
        %v931 = vld [vmem:[%s6 + $0x48] sm:$0xff]
        %v932 = vld [vmem:[%s6 + $0x50] sm:$0xff]
        %v933 = vld [vmem:[%s6 + $0x58] sm:$0xff]
        %v934 = vld [vmem:[%s6 + $0x60] sm:$0xff]
        %v935 = vld [vmem:[%s6 + $0x68] sm:$0xff]
        %v936 = vld [vmem:[%s6 + $0x70] sm:$0xff]
        %v937 = vld [vmem:[%s6 + $0x78] sm:$0xff]
        %938 = vmatpush.msra.mxu0 %v937
        %939 = vmatpush.msra.mxu0 %v936
        %940 = vmatpush.msra.mxu0 %v935
        %941 = vmatpush.msra.mxu0 %v934
        %942 = vmatpush.msra.mxu0 %v933
        %943 = vmatpush.msra.mxu0 %v932
        %944 = vmatpush.msra.mxu0 %v931
        %945 = vmatpush.msra.mxu0 %v930
        %946 = vmatpush.msra.mxu0 %v929
        %947 = vmatpush.msra.mxu0 %v928
        %948 = vmatpush.msra.mxu0 %v927
        %949 = vmatpush.msra.mxu0 %v926
        %950 = vmatpush.msra.mxu0 %v925
        %951 = vmatpush.msra.mxu0 %v924
        %952 = vmatpush.msra.mxu0 %v923
        %953 = vmatpush.msra.mxu0 %v922
        %954 = vmatmul.f32.gmra.mxu0 %v920
        %v955 = vpop.f32.mrf.mxu0
        %v956 = vadd.f32 0.0, %v955
        %957 = vdwg.mxu0
        %v958 = vadd.f32 %v921, %v956
        %959 = vst.msk [vmem:[#allocation4] sm:$0xff] %vm416, %v958
        %v960 = vld [vmem:[#allocation4] sm:$0xff]
        %v961 = vadd.f32 %v857, %v960
        %v963 = vperm.slane %v415, 0
        %v965 = vadd.f32 %v961, %v963
        %966 = vst.msk [vmem:[%s404] sm:$0xff] %vm416, %v965
        %s967 = sand.u32 %s291, 1
        %s968 = scalar_lea.sflag [#allocation6], %s967
        %s969 = sand.u32 %s291, 1
        %s970 = smul.addr %s969, 8
        %s971 = scalar_lea.vmem [#allocation5], %s970
        // Predicated region
        $region69: #{tpu_custom_call.1} parent=67 // pred_check
          %p972 = pneg %p301
        $region70: #{tpu_custom_call.1} parent=67 // pred_check_branch
          %974 = sbr.rel (%p972) target = $region72
        $region71: #{tpu_custom_call.1} parent=67 // pred_region
          %976 = vsyncadd %s968, 0
          %s977 = smul.addr %s26, 8
          %s978 = scalar_lea.hbm %s12, %s977
          %s980 = sshll.u32 %s971, 4
          %s981 = int_to_ptr.vmem [resolvable:$true] %s980
          %s982 = sshll.u32 %s978, 4
          %s983 = int_to_ptr.hbm [resolvable:$true] %s982
          %985 = dma.vmem_to_hbm [thread:$0]  %s981, 128, %s983, %s968
        $region72: #{tpu_custom_call.1} parent=67 // pred_fallthru
          _
      $region68: #{tpu_custom_call.1} parent=5 // pred_fallthru
        _
      %p986 = scmp.le.s32.totalorder 2, %s21
      // Predicated region
      $region73: #{tpu_custom_call.1} parent=5 // pred_check
        %p987 = pneg %p986
      $region74: #{tpu_custom_call.1} parent=5 // pred_check_branch
        %989 = sbr.rel (%p987) target = $region76
      $region75: #{tpu_custom_call.1} parent=5 // pred_region
        %s990 = ssub.s32 %s21, 2
        // Predicated region
        $region77: #{tpu_custom_call.1} parent=75 // pred_check
          %p991 = pneg %p307
        $region78: #{tpu_custom_call.1} parent=75 // pred_check_branch
          %993 = sbr.rel (%p991) target = $region80
        $region79: #{tpu_custom_call.1} parent=75 // pred_region
          %s994 = sand.u32 %s292, 1
          %s995 = scalar_lea.sflag [#allocation6], %s994
          %s996 = sand.u32 %s292, 1
          %s997 = smul.addr %s996, 8
          %s998 = scalar_lea.vmem [#allocation5], %s997
          %1000 = dma.done %s995, 128
        $region80: #{tpu_custom_call.1} parent=75 // pred_fallthru
          _
      $region76: #{tpu_custom_call.1} parent=5 // pred_fallthru
        _
    $region6: #{tpu_custom_call.1} parent=1 // loop_footer
      %s25 = sadd.s32 1, %s21
    $region7: #{tpu_custom_call.1} parent=1 // loop_footer_branch
      %20 = sbr.rel target = $region3
    $region8: #{tpu_custom_call.1} parent=1 // loop_exit
      _
    %1001 = vsyncpa [#allocation6], 1
    %s1002 = scalar_lea.sflag [#allocation6], 1
    %1003 = vsyncpa %s1002, 1

</llo_original>
